<compile_context>
chip_gen: v6e
topology: v6e:2x2x1
jax: 0.10.0
libtpu: 0.0.40
codegen_flags: <defaults>
</compile_context>

<pallas_src>
import functools

import numpy as np
import jax
import jax.numpy as jnp
from jax import lax
from jax.experimental import pallas as pl
from jax.experimental.pallas import tpu as pltpu

EPS = 1e-5
SLAB_W = 128  # lane-dense fused output width


def encoder_kernel(
    # activations
    rna_ref, atac_ref, snv_ref, cov_ref,
    # shared_encoder params (no b1: cancelled by BN), w1 split into a/b halves
    w1a_ref, w1b_ref, g1_ref, be1_ref, w2_ref, b2_ref,
    # SNV_shared_encoder params (no b3: cancelled by BN)
    w3_ref, g2_ref, be2_ref, w4_ref, b4_ref,
    # merged + zero-padded variant/invariant projection params (width SLAB_W)
    w56a_ref, w56b_ref, w56c_ref, b56_ref,
    # adversarial_network params, zero-padded to the slab layout
    w7p_ref, b7_ref, w8p_ref, b8p_ref,
    # fused output slab: [variant | invariant | covpred | pad]
    out_ref,
    *, latent_dim, cov_dim,
):
    f32 = jnp.float32
    bf16 = jnp.bfloat16

    def bn_relu(h, g, be):
        # training-mode BatchNorm1d (biased variance), stats in f32
        mu = jnp.mean(h, axis=0, keepdims=True)
        var = jnp.mean((h - mu) ** 2, axis=0, keepdims=True)
        return jnp.maximum((h - mu) * lax.rsqrt(var + EPS) * g + be, 0.0)

    # ---- shared_encoder: Linear -> BN -> ReLU -> Linear -> ReLU ----
    # split-matmul == cat(scRNA, ATAC) @ w1 ; bias b1 cancels under BN
    h1 = (jnp.dot(rna_ref[...], w1a_ref[...], preferred_element_type=f32)
          + jnp.dot(atac_ref[...], w1b_ref[...], preferred_element_type=f32))
    h1 = bn_relu(h1, g1_ref[...], be1_ref[...])
    h2 = jnp.dot(h1.astype(bf16), w2_ref[...], preferred_element_type=f32) + b2_ref[...]
    h2 = jnp.maximum(h2, 0.0)                                          # (B, 256) f32

    # ---- SNV_shared_encoder: Linear -> BN -> ReLU -> Linear -> ReLU ----
    s1 = jnp.dot(snv_ref[...], w3_ref[...], preferred_element_type=f32)
    s1 = bn_relu(s1, g2_ref[...], be2_ref[...])
    s2 = jnp.dot(s1.astype(bf16), w4_ref[...], preferred_element_type=f32) + b4_ref[...]
    s2 = jnp.maximum(s2, 0.0)                                          # (B, 128) f32

    # ---- merged variant + invariant projection, lane-padded to SLAB_W ----
    # columns: [0, L) variant, [L, 2L) invariant, [2L, SLAB_W) exact zeros
    vi = (jnp.dot(h2.astype(bf16), w56a_ref[...], preferred_element_type=f32)
          + jnp.dot(s2.astype(bf16), w56b_ref[...], preferred_element_type=f32)
          + jnp.dot(cov_ref[...], w56c_ref[...], preferred_element_type=f32))
    vi = jnp.maximum(vi + b56_ref[...], 0.0)                           # (B, SLAB_W) f32

    # ---- adversarial_network: Linear -> ReLU -> Linear -> Sigmoid ----
    # w7p has nonzero rows only at [L, 2L) -> consumes exactly the invariant half.
    a1 = jnp.dot(vi.astype(bf16), w7p_ref[...], preferred_element_type=f32) + b7_ref[...]
    a1 = jnp.maximum(a1, 0.0)                                          # (B, 128) f32
    # w8p places the logits at output columns [2L, 2L + C); pad columns are 0.
    logits = jnp.dot(a1.astype(bf16), w8p_ref[...], preferred_element_type=f32) + b8p_ref[...]

    B = vi.shape[0]
    cols = lax.broadcasted_iota(jnp.int32, (B, SLAB_W), 1)
    cov_mask = (cols >= 2 * latent_dim) & (cols < 2 * latent_dim + cov_dim)
    covpred = jnp.where(cov_mask, jax.nn.sigmoid(logits), 0.0)

    # single unmasked 128-lane store of the fused slab
    out_ref[...] = vi + covpred


def init_params(key, scRNA_dim, ATAC_dim, SNV_dim, latent_dim, covariate_dim):
    """Deterministic synthetic params. Weights stored as (in_features, out_features)."""
    in1 = scRNA_dim + ATAC_dim
    dims = [
        ("w1", (in1, 512)), ("b1", (1, 512)), ("g1", (1, 512)), ("be1", (1, 512)),
        ("w2", (512, 256)), ("b2", (1, 256)),
        ("w3", (SNV_dim, 256)), ("b3", (1, 256)), ("g2", (1, 256)), ("be2", (1, 256)),
        ("w4", (256, 128)), ("b4", (1, 128)),
        ("w5", (256 + 128 + covariate_dim, latent_dim)), ("b5", (1, latent_dim)),
        ("w6", (256 + 128, latent_dim)), ("b6", (1, latent_dim)),
        ("w7", (latent_dim, 128)), ("b7", (1, 128)),
        ("w8", (128, covariate_dim)), ("b8", (1, covariate_dim)),
    ]
    keys = jax.random.split(key, len(dims))
    params = {}
    for (name, shape), k in zip(dims, keys):
        if name.startswith("g"):
            params[name] = jnp.ones(shape, jnp.float32)        # BN gamma init = 1
        elif name.startswith("be"):
            params[name] = jnp.zeros(shape, jnp.float32)       # BN beta init = 0
        else:                                                  # weights AND biases random
            params[name] = 0.05 * jax.random.normal(k, shape, jnp.float32)
    return params


@functools.partial(jax.jit, static_argnames=("scRNA_dim",))
def _encoder_forward_impl(scRNA, ATAC, SNV, covariate, params, scRNA_dim):
    B = scRNA.shape[0]
    latent_dim = params["w5"].shape[1]
    cov_dim = covariate.shape[1]
    f32 = jnp.float32
    bf16 = jnp.bfloat16
    L2 = 2 * latent_dim
    assert L2 + cov_dim <= SLAB_W

    # ---- weight plumbing (pure layout work, done once per call by XLA) ----
    # split first-layer weight instead of concatenating the inputs
    w1a = params["w1"][:scRNA_dim].astype(bf16)
    w1b = params["w1"][scRNA_dim:].astype(bf16)

    # merged variant/invariant projection, zero-padded to SLAB_W lanes
    zpadL = jnp.zeros((0, 0), f32)  # placeholder to keep linter quiet
    del zpadL
    w5a, w5b, w5c = params["w5"][:256], params["w5"][256:384], params["w5"][384:]
    w6a, w6b = params["w6"][:256], params["w6"][256:]
    pad_vi = SLAB_W - L2
    w56a = jnp.concatenate([w5a, w6a, jnp.zeros((256, pad_vi), f32)], axis=1).astype(bf16)
    w56b = jnp.concatenate([w5b, w6b, jnp.zeros((128, pad_vi), f32)], axis=1).astype(bf16)
    w56c = jnp.concatenate(
        [w5c, jnp.zeros((cov_dim, latent_dim + pad_vi), f32)], axis=1).astype(bf16)
    b56 = jnp.concatenate(
        [params["b5"], params["b6"], jnp.zeros((1, pad_vi), f32)], axis=1)

    # adversarial net: w7 consumes only the invariant columns of the slab,
    # w8/b8 write their logits at slab columns [2L, 2L + C)
    w7p = jnp.concatenate(
        [jnp.zeros((latent_dim, 128), f32), params["w7"],
         jnp.zeros((SLAB_W - L2, 128), f32)], axis=0).astype(bf16)
    pad_cp = SLAB_W - L2 - cov_dim
    w8p = jnp.concatenate(
        [jnp.zeros((128, L2), f32), params["w8"], jnp.zeros((128, pad_cp), f32)],
        axis=1).astype(bf16)
    b8p = jnp.concatenate(
        [jnp.zeros((1, L2), f32), params["b8"], jnp.zeros((1, pad_cp), f32)], axis=1)

    inputs = (
        scRNA.astype(bf16), ATAC.astype(bf16), SNV.astype(bf16), covariate.astype(bf16),
        w1a, w1b, params["g1"], params["be1"],
        params["w2"].astype(bf16), params["b2"],
        params["w3"].astype(bf16), params["g2"], params["be2"],
        params["w4"].astype(bf16), params["b4"],
        w56a, w56b, w56c, b56,
        w7p, params["b7"], w8p, b8p,
    )

    vmem = pl.BlockSpec(memory_space=pltpu.MemorySpace.VMEM)
    kernel = functools.partial(encoder_kernel, latent_dim=latent_dim, cov_dim=cov_dim)
    slab = pl.pallas_call(
        kernel,
        out_shape=jax.ShapeDtypeStruct((B, SLAB_W), jnp.float32),
        in_specs=[vmem] * len(inputs),
        out_specs=vmem,
        compiler_params=pltpu.CompilerParams(vmem_limit_bytes=32 * 1024 * 1024),
    )(*inputs)

    variant = slab[:, :latent_dim]
    invariant = slab[:, latent_dim:L2]
    covpred = slab[:, L2:L2 + cov_dim]
    return variant, invariant, covpred


def encoder_forward(scRNA, ATAC, SNV, covariate, params):
    return _encoder_forward_impl(scRNA, ATAC, SNV, covariate, params,
                                 scRNA_dim=scRNA.shape[1])


def encoder_reference(scRNA, ATAC, SNV, covariate, params):
    """Pure-JAX reference of the PyTorch forward (training-mode BatchNorm),
    with the same bf16-matmul / f32-accumulate precision policy as the kernel.
    Includes b1/b3 (the kernel drops them; BN cancels them exactly)."""
    bf16 = jnp.bfloat16
    f32 = jnp.float32

    def dot(a, w):
        return jnp.dot(a.astype(bf16), w.astype(bf16), preferred_element_type=f32)

    def bn(h, g, b):
        mu = jnp.mean(h, axis=0, keepdims=True)
        var = jnp.mean((h - mu) ** 2, axis=0, keepdims=True)
        return (h - mu) * lax.rsqrt(var + EPS) * g + b

    x = jnp.concatenate([scRNA, ATAC], axis=1)
    h = jnp.maximum(bn(dot(x, params["w1"]) + params["b1"], params["g1"], params["be1"]), 0.0)
    h = jnp.maximum(dot(h, params["w2"]) + params["b2"], 0.0)
    s = jnp.maximum(bn(dot(SNV, params["w3"]) + params["b3"], params["g2"], params["be2"]), 0.0)
    s = jnp.maximum(dot(s, params["w4"]) + params["b4"], 0.0)
    comb = jnp.concatenate([h, s], axis=1)
    variant = jnp.maximum(
        dot(jnp.concatenate([comb, covariate], axis=1), params["w5"]) + params["b5"], 0.0)
    invariant = jnp.maximum(dot(comb, params["w6"]) + params["b6"], 0.0)
    a = jnp.maximum(dot(invariant, params["w7"]) + params["b7"], 0.0)
    covpred = jax.nn.sigmoid(dot(a, params["w8"]) + params["b8"])
    return variant, invariant, covpred


if __name__ == "__main__":
    scRNA_dim, ATAC_dim, SNV_dim = 32, 32, 32
    latent_dim, covariate_dim = 16, 4
    B = 8

    key = jax.random.PRNGKey(0)
    k_p, k_r, k_a, k_s, k_c = jax.random.split(key, 5)
    params = init_params(k_p, scRNA_dim, ATAC_dim, SNV_dim, latent_dim, covariate_dim)

    scRNA = jax.random.normal(k_r, (B, scRNA_dim), jnp.float32)
    ATAC = jax.random.normal(k_a, (B, ATAC_dim), jnp.float32)
    SNV = jax.random.normal(k_s, (B, SNV_dim), jnp.float32)
    covariate = jax.random.normal(k_c, (B, covariate_dim), jnp.float32)

    outs = encoder_forward(scRNA, ATAC, SNV, covariate, params)
    outs = jax.block_until_ready(outs)

    refs = encoder_reference(scRNA, ATAC, SNV, covariate, params)
    for o, r in zip(outs, refs):
        np.testing.assert_allclose(np.asarray(o), np.asarray(r), rtol=5e-3, atol=5e-3)

    print("KERNEL_OK")
</pallas_src>

<mosaic_0001>
module attributes {stable_mosaic.version = 11 : i64} {
  func.func @encoder_kernel(%arg0: memref<8x32xbf16, #tpu.memory_space<vmem>>, %arg1: memref<8x32xbf16, #tpu.memory_space<vmem>>, %arg2: memref<8x32xbf16, #tpu.memory_space<vmem>>, %arg3: memref<8x4xbf16, #tpu.memory_space<vmem>>, %arg4: memref<32x512xbf16, #tpu.memory_space<vmem>>, %arg5: memref<32x512xbf16, #tpu.memory_space<vmem>>, %arg6: memref<1x512xf32, #tpu.memory_space<vmem>>, %arg7: memref<1x512xf32, #tpu.memory_space<vmem>>, %arg8: memref<512x256xbf16, #tpu.memory_space<vmem>>, %arg9: memref<1x256xf32, #tpu.memory_space<vmem>>, %arg10: memref<32x256xbf16, #tpu.memory_space<vmem>>, %arg11: memref<1x256xf32, #tpu.memory_space<vmem>>, %arg12: memref<1x256xf32, #tpu.memory_space<vmem>>, %arg13: memref<256x128xbf16, #tpu.memory_space<vmem>>, %arg14: memref<1x128xf32, #tpu.memory_space<vmem>>, %arg15: memref<256x128xbf16, #tpu.memory_space<vmem>>, %arg16: memref<128x128xbf16, #tpu.memory_space<vmem>>, %arg17: memref<4x128xbf16, #tpu.memory_space<vmem>>, %arg18: memref<1x128xf32, #tpu.memory_space<vmem>>, %arg19: memref<128x128xbf16, #tpu.memory_space<vmem>>, %arg20: memref<1x128xf32, #tpu.memory_space<vmem>>, %arg21: memref<128x128xbf16, #tpu.memory_space<vmem>>, %arg22: memref<1x128xf32, #tpu.memory_space<vmem>>, %arg23: memref<8x128xf32, #tpu.memory_space<vmem>>) attributes {dimension_semantics = [], scalar_prefetch = 0 : i64, scratch_operands = 0 : i64, tpu.core_type = #tpu.core_type<tc>} {
    %c0 = arith.constant 0 : index
    %c0_0 = arith.constant 0 : index
    %0 = vector.load %arg0[%c0, %c0_0] : memref<8x32xbf16, #tpu.memory_space<vmem>>, vector<8x32xbf16>
    %c0_1 = arith.constant 0 : index
    %c0_2 = arith.constant 0 : index
    %1 = vector.load %arg4[%c0_1, %c0_2] : memref<32x512xbf16, #tpu.memory_space<vmem>>, vector<32x512xbf16>
    %cst = arith.constant dense<0.000000e+00> : vector<8x512xf32>
    %2 = tpu.matmul %0, %1, %cst {dimension_numbers = #tpu.dot_dimension_numbers<[1], [0], [0], [1], [0, 0, 1, 1], [], []>} : vector<8x32xbf16>, vector<32x512xbf16>, vector<8x512xf32> -> vector<8x512xf32>
    %c0_3 = arith.constant 0 : index
    %c0_4 = arith.constant 0 : index
    %3 = vector.load %arg1[%c0_3, %c0_4] : memref<8x32xbf16, #tpu.memory_space<vmem>>, vector<8x32xbf16>
    %c0_5 = arith.constant 0 : index
    %c0_6 = arith.constant 0 : index
    %4 = vector.load %arg5[%c0_5, %c0_6] : memref<32x512xbf16, #tpu.memory_space<vmem>>, vector<32x512xbf16>
    %cst_7 = arith.constant dense<0.000000e+00> : vector<8x512xf32>
    %5 = tpu.matmul %3, %4, %cst_7 {dimension_numbers = #tpu.dot_dimension_numbers<[1], [0], [0], [1], [0, 0, 1, 1], [], []>} : vector<8x32xbf16>, vector<32x512xbf16>, vector<8x512xf32> -> vector<8x512xf32>
    %6 = arith.addf %2, %5 : vector<8x512xf32>
    %c0_8 = arith.constant 0 : index
    %c0_9 = arith.constant 0 : index
    %7 = vector.load %arg6[%c0_8, %c0_9] : memref<1x512xf32, #tpu.memory_space<vmem>>, vector<1x512xf32>
    %c0_10 = arith.constant 0 : index
    %c0_11 = arith.constant 0 : index
    %8 = vector.load %arg7[%c0_10, %c0_11] : memref<1x512xf32, #tpu.memory_space<vmem>>, vector<1x512xf32>
    %cst_12 = arith.constant dense<0.000000e+00> : vector<512xf32>
    %9 = vector.multi_reduction <add>, %6, %cst_12 [0] : vector<8x512xf32> to vector<512xf32>
    %10 = vector.shape_cast %9 : vector<512xf32> to vector<1x512xf32>
    %cst_13 = arith.constant 8.000000e+00 : f32
    %11 = vector.broadcast %cst_13 : f32 to vector<1x512xf32>
    %12 = arith.divf %10, %11 : vector<1x512xf32>
    %13 = vector.broadcast %12 : vector<1x512xf32> to vector<8x512xf32>
    %14 = arith.subf %6, %13 : vector<8x512xf32>
    %15 = arith.mulf %14, %14 : vector<8x512xf32>
    %cst_14 = arith.constant dense<0.000000e+00> : vector<512xf32>
    %16 = vector.multi_reduction <add>, %15, %cst_14 [0] : vector<8x512xf32> to vector<512xf32>
    %17 = vector.shape_cast %16 : vector<512xf32> to vector<1x512xf32>
    %cst_15 = arith.constant 8.000000e+00 : f32
    %18 = vector.broadcast %cst_15 : f32 to vector<1x512xf32>
    %19 = arith.divf %17, %18 : vector<1x512xf32>
    %20 = vector.broadcast %12 : vector<1x512xf32> to vector<8x512xf32>
    %21 = arith.subf %6, %20 : vector<8x512xf32>
    %cst_16 = arith.constant 9.99999974E-6 : f32
    %22 = vector.broadcast %cst_16 : f32 to vector<1x512xf32>
    %23 = arith.addf %19, %22 : vector<1x512xf32>
    %24 = math.rsqrt %23 : vector<1x512xf32>
    %25 = vector.broadcast %24 : vector<1x512xf32> to vector<8x512xf32>
    %26 = arith.mulf %21, %25 : vector<8x512xf32>
    %27 = vector.broadcast %7 : vector<1x512xf32> to vector<8x512xf32>
    %28 = arith.mulf %26, %27 : vector<8x512xf32>
    %29 = vector.broadcast %8 : vector<1x512xf32> to vector<8x512xf32>
    %30 = arith.addf %28, %29 : vector<8x512xf32>
    %cst_17 = arith.constant 0.000000e+00 : f32
    %31 = vector.broadcast %cst_17 : f32 to vector<8x512xf32>
    %32 = arith.maximumf %30, %31 : vector<8x512xf32>
    %33 = arith.truncf %32 : vector<8x512xf32> to vector<8x512xbf16>
    %c0_18 = arith.constant 0 : index
    %c0_19 = arith.constant 0 : index
    %34 = vector.load %arg8[%c0_18, %c0_19] : memref<512x256xbf16, #tpu.memory_space<vmem>>, vector<512x256xbf16>
    %cst_20 = arith.constant dense<0.000000e+00> : vector<8x256xf32>
    %35 = tpu.matmul %33, %34, %cst_20 {dimension_numbers = #tpu.dot_dimension_numbers<[1], [0], [0], [1], [0, 0, 1, 1], [], []>} : vector<8x512xbf16>, vector<512x256xbf16>, vector<8x256xf32> -> vector<8x256xf32>
    %c0_21 = arith.constant 0 : index
    %c0_22 = arith.constant 0 : index
    %36 = vector.load %arg9[%c0_21, %c0_22] : memref<1x256xf32, #tpu.memory_space<vmem>>, vector<1x256xf32>
    %37 = vector.broadcast %36 : vector<1x256xf32> to vector<8x256xf32>
    %38 = arith.addf %35, %37 : vector<8x256xf32>
    %cst_23 = arith.constant 0.000000e+00 : f32
    %39 = vector.broadcast %cst_23 : f32 to vector<8x256xf32>
    %40 = arith.maximumf %38, %39 : vector<8x256xf32>
    %c0_24 = arith.constant 0 : index
    %c0_25 = arith.constant 0 : index
    %41 = vector.load %arg2[%c0_24, %c0_25] : memref<8x32xbf16, #tpu.memory_space<vmem>>, vector<8x32xbf16>
    %c0_26 = arith.constant 0 : index
    %c0_27 = arith.constant 0 : index
    %42 = vector.load %arg10[%c0_26, %c0_27] : memref<32x256xbf16, #tpu.memory_space<vmem>>, vector<32x256xbf16>
    %cst_28 = arith.constant dense<0.000000e+00> : vector<8x256xf32>
    %43 = tpu.matmul %41, %42, %cst_28 {dimension_numbers = #tpu.dot_dimension_numbers<[1], [0], [0], [1], [0, 0, 1, 1], [], []>} : vector<8x32xbf16>, vector<32x256xbf16>, vector<8x256xf32> -> vector<8x256xf32>
    %c0_29 = arith.constant 0 : index
    %c0_30 = arith.constant 0 : index
    %44 = vector.load %arg11[%c0_29, %c0_30] : memref<1x256xf32, #tpu.memory_space<vmem>>, vector<1x256xf32>
    %c0_31 = arith.constant 0 : index
    %c0_32 = arith.constant 0 : index
    %45 = vector.load %arg12[%c0_31, %c0_32] : memref<1x256xf32, #tpu.memory_space<vmem>>, vector<1x256xf32>
    %cst_33 = arith.constant dense<0.000000e+00> : vector<256xf32>
    %46 = vector.multi_reduction <add>, %43, %cst_33 [0] : vector<8x256xf32> to vector<256xf32>
    %47 = vector.shape_cast %46 : vector<256xf32> to vector<1x256xf32>
    %cst_34 = arith.constant 8.000000e+00 : f32
    %48 = vector.broadcast %cst_34 : f32 to vector<1x256xf32>
    %49 = arith.divf %47, %48 : vector<1x256xf32>
    %50 = vector.broadcast %49 : vector<1x256xf32> to vector<8x256xf32>
    %51 = arith.subf %43, %50 : vector<8x256xf32>
    %52 = arith.mulf %51, %51 : vector<8x256xf32>
    %cst_35 = arith.constant dense<0.000000e+00> : vector<256xf32>
    %53 = vector.multi_reduction <add>, %52, %cst_35 [0] : vector<8x256xf32> to vector<256xf32>
    %54 = vector.shape_cast %53 : vector<256xf32> to vector<1x256xf32>
    %cst_36 = arith.constant 8.000000e+00 : f32
    %55 = vector.broadcast %cst_36 : f32 to vector<1x256xf32>
    %56 = arith.divf %54, %55 : vector<1x256xf32>
    %57 = vector.broadcast %49 : vector<1x256xf32> to vector<8x256xf32>
    %58 = arith.subf %43, %57 : vector<8x256xf32>
    %cst_37 = arith.constant 9.99999974E-6 : f32
    %59 = vector.broadcast %cst_37 : f32 to vector<1x256xf32>
    %60 = arith.addf %56, %59 : vector<1x256xf32>
    %61 = math.rsqrt %60 : vector<1x256xf32>
    %62 = vector.broadcast %61 : vector<1x256xf32> to vector<8x256xf32>
    %63 = arith.mulf %58, %62 : vector<8x256xf32>
    %64 = vector.broadcast %44 : vector<1x256xf32> to vector<8x256xf32>
    %65 = arith.mulf %63, %64 : vector<8x256xf32>
    %66 = vector.broadcast %45 : vector<1x256xf32> to vector<8x256xf32>
    %67 = arith.addf %65, %66 : vector<8x256xf32>
    %cst_38 = arith.constant 0.000000e+00 : f32
    %68 = vector.broadcast %cst_38 : f32 to vector<8x256xf32>
    %69 = arith.maximumf %67, %68 : vector<8x256xf32>
    %70 = arith.truncf %69 : vector<8x256xf32> to vector<8x256xbf16>
    %c0_39 = arith.constant 0 : index
    %c0_40 = arith.constant 0 : index
    %71 = vector.load %arg13[%c0_39, %c0_40] : memref<256x128xbf16, #tpu.memory_space<vmem>>, vector<256x128xbf16>
    %cst_41 = arith.constant dense<0.000000e+00> : vector<8x128xf32>
    %72 = tpu.matmul %70, %71, %cst_41 {dimension_numbers = #tpu.dot_dimension_numbers<[1], [0], [0], [1], [0, 0, 1, 1], [], []>} : vector<8x256xbf16>, vector<256x128xbf16>, vector<8x128xf32> -> vector<8x128xf32>
    %c0_42 = arith.constant 0 : index
    %c0_43 = arith.constant 0 : index
    %73 = vector.load %arg14[%c0_42, %c0_43] : memref<1x128xf32, #tpu.memory_space<vmem>>, vector<1x128xf32>
    %74 = vector.broadcast %73 : vector<1x128xf32> to vector<8x128xf32>
    %75 = arith.addf %72, %74 : vector<8x128xf32>
    %cst_44 = arith.constant 0.000000e+00 : f32
    %76 = vector.broadcast %cst_44 : f32 to vector<8x128xf32>
    %77 = arith.maximumf %75, %76 : vector<8x128xf32>
    %78 = arith.truncf %40 : vector<8x256xf32> to vector<8x256xbf16>
    %c0_45 = arith.constant 0 : index
    %c0_46 = arith.constant 0 : index
    %79 = vector.load %arg15[%c0_45, %c0_46] : memref<256x128xbf16, #tpu.memory_space<vmem>>, vector<256x128xbf16>
    %cst_47 = arith.constant dense<0.000000e+00> : vector<8x128xf32>
    %80 = tpu.matmul %78, %79, %cst_47 {dimension_numbers = #tpu.dot_dimension_numbers<[1], [0], [0], [1], [0, 0, 1, 1], [], []>} : vector<8x256xbf16>, vector<256x128xbf16>, vector<8x128xf32> -> vector<8x128xf32>
    %81 = arith.truncf %77 : vector<8x128xf32> to vector<8x128xbf16>
    %c0_48 = arith.constant 0 : index
    %c0_49 = arith.constant 0 : index
    %82 = vector.load %arg16[%c0_48, %c0_49] : memref<128x128xbf16, #tpu.memory_space<vmem>>, vector<128x128xbf16>
    %cst_50 = arith.constant dense<0.000000e+00> : vector<8x128xf32>
    %83 = tpu.matmul %81, %82, %cst_50 {dimension_numbers = #tpu.dot_dimension_numbers<[1], [0], [0], [1], [0, 0, 1, 1], [], []>} : vector<8x128xbf16>, vector<128x128xbf16>, vector<8x128xf32> -> vector<8x128xf32>
    %84 = arith.addf %80, %83 : vector<8x128xf32>
    %c0_51 = arith.constant 0 : index
    %c0_52 = arith.constant 0 : index
    %85 = vector.load %arg3[%c0_51, %c0_52] : memref<8x4xbf16, #tpu.memory_space<vmem>>, vector<8x4xbf16>
    %c0_53 = arith.constant 0 : index
    %c0_54 = arith.constant 0 : index
    %86 = vector.load %arg17[%c0_53, %c0_54] : memref<4x128xbf16, #tpu.memory_space<vmem>>, vector<4x128xbf16>
    %cst_55 = arith.constant dense<0.000000e+00> : vector<8x128xf32>
    %87 = tpu.matmul %85, %86, %cst_55 {dimension_numbers = #tpu.dot_dimension_numbers<[1], [0], [0], [1], [0, 0, 1, 1], [], []>} : vector<8x4xbf16>, vector<4x128xbf16>, vector<8x128xf32> -> vector<8x128xf32>
    %88 = arith.addf %84, %87 : vector<8x128xf32>
    %c0_56 = arith.constant 0 : index
    %c0_57 = arith.constant 0 : index
    %89 = vector.load %arg18[%c0_56, %c0_57] : memref<1x128xf32, #tpu.memory_space<vmem>>, vector<1x128xf32>
    %90 = vector.broadcast %89 : vector<1x128xf32> to vector<8x128xf32>
    %91 = arith.addf %88, %90 : vector<8x128xf32>
    %cst_58 = arith.constant 0.000000e+00 : f32
    %92 = vector.broadcast %cst_58 : f32 to vector<8x128xf32>
    %93 = arith.maximumf %91, %92 : vector<8x128xf32>
    %94 = arith.truncf %93 : vector<8x128xf32> to vector<8x128xbf16>
    %c0_59 = arith.constant 0 : index
    %c0_60 = arith.constant 0 : index
    %95 = vector.load %arg19[%c0_59, %c0_60] : memref<128x128xbf16, #tpu.memory_space<vmem>>, vector<128x128xbf16>
    %cst_61 = arith.constant dense<0.000000e+00> : vector<8x128xf32>
    %96 = tpu.matmul %94, %95, %cst_61 {dimension_numbers = #tpu.dot_dimension_numbers<[1], [0], [0], [1], [0, 0, 1, 1], [], []>} : vector<8x128xbf16>, vector<128x128xbf16>, vector<8x128xf32> -> vector<8x128xf32>
    %c0_62 = arith.constant 0 : index
    %c0_63 = arith.constant 0 : index
    %97 = vector.load %arg20[%c0_62, %c0_63] : memref<1x128xf32, #tpu.memory_space<vmem>>, vector<1x128xf32>
    %98 = vector.broadcast %97 : vector<1x128xf32> to vector<8x128xf32>
    %99 = arith.addf %96, %98 : vector<8x128xf32>
    %cst_64 = arith.constant 0.000000e+00 : f32
    %100 = vector.broadcast %cst_64 : f32 to vector<8x128xf32>
    %101 = arith.maximumf %99, %100 : vector<8x128xf32>
    %102 = arith.truncf %101 : vector<8x128xf32> to vector<8x128xbf16>
    %c0_65 = arith.constant 0 : index
    %c0_66 = arith.constant 0 : index
    %103 = vector.load %arg21[%c0_65, %c0_66] : memref<128x128xbf16, #tpu.memory_space<vmem>>, vector<128x128xbf16>
    %cst_67 = arith.constant dense<0.000000e+00> : vector<8x128xf32>
    %104 = tpu.matmul %102, %103, %cst_67 {dimension_numbers = #tpu.dot_dimension_numbers<[1], [0], [0], [1], [0, 0, 1, 1], [], []>} : vector<8x128xbf16>, vector<128x128xbf16>, vector<8x128xf32> -> vector<8x128xf32>
    %c0_68 = arith.constant 0 : index
    %c0_69 = arith.constant 0 : index
    %105 = vector.load %arg22[%c0_68, %c0_69] : memref<1x128xf32, #tpu.memory_space<vmem>>, vector<1x128xf32>
    %106 = vector.broadcast %105 : vector<1x128xf32> to vector<8x128xf32>
    %107 = arith.addf %104, %106 : vector<8x128xf32>
    %108 = tpu.iota {dimensions = array<i32: 1>} : vector<8x128xi32>
    %c32_i32 = arith.constant 32 : i32
    %109 = vector.broadcast %c32_i32 : i32 to vector<8x128xi32>
    %110 = arith.cmpi sge, %108, %109 : vector<8x128xi32>
    %c36_i32 = arith.constant 36 : i32
    %111 = vector.broadcast %c36_i32 : i32 to vector<8x128xi32>
    %112 = arith.cmpi slt, %108, %111 : vector<8x128xi32>
    %113 = arith.andi %110, %112 : vector<8x128xi1>
    %114 = arith.negf %107 : vector<8x128xf32>
    %115 = math.exp %114 : vector<8x128xf32>
    %cst_70 = arith.constant 1.000000e+00 : f32
    %116 = vector.broadcast %cst_70 : f32 to vector<8x128xf32>
    %117 = arith.addf %116, %115 : vector<8x128xf32>
    %118 = arith.divf %116, %117 : vector<8x128xf32>
    %cst_71 = arith.constant 0.000000e+00 : f32
    %119 = vector.broadcast %cst_71 : f32 to vector<8x128xf32>
    %120 = arith.select %113, %118, %119 : vector<8x128xi1>, vector<8x128xf32>
    %121 = arith.addf %93, %120 : vector<8x128xf32>
    %c0_72 = arith.constant 0 : index
    %c0_73 = arith.constant 0 : index
    %122 = vector.load %arg23[%c0_72, %c0_73] : memref<8x128xf32, #tpu.memory_space<vmem>>, vector<8x128xf32>
    tpu.vector_store %arg23[%c0_72, %c0_73], %121 {strides = array<i32>} : memref<8x128xf32, #tpu.memory_space<vmem>>, vector<8x128xf32>,
    return
  }
}

</mosaic_0001>

<llo_original>
// kernel: _encoder_forward_impl.1
$region0: #{_encoder_forward_impl.1}
  #allocation0 [shape = 'u32[]', space=smem, size = 0x4, offset = 0x4, fixed_abs, tag = 'smem constant byte address 0x4 - core index']
  #allocation1 [shape = 'u32[144,128]{1,0:T(1,128)}', space=vmem, size = 0x12000, scoped, tag = 'internal scratch']
  %s0 = inlined_call_operand.vmem [shape: bf16[8,32], index: 0, kind: input, shape index: {}]
  %s1 = inlined_call_operand.vmem [shape: bf16[8,32], index: 1, kind: input, shape index: {}]
  %s2 = inlined_call_operand.vmem [shape: bf16[8,32], index: 2, kind: input, shape index: {}]
  %s3 = inlined_call_operand.vmem [shape: bf16[8,4], index: 3, kind: input, shape index: {}]
  %s4 = inlined_call_operand.vmem [shape: bf16[32,512], index: 4, kind: input, shape index: {}]
  %s5 = inlined_call_operand.vmem [shape: bf16[32,512], index: 5, kind: input, shape index: {}]
  %s6 = inlined_call_operand.vmem [shape: f32[1,512], index: 6, kind: input, shape index: {}]
  %s7 = inlined_call_operand.vmem [shape: f32[1,512], index: 7, kind: input, shape index: {}]
  %s8 = inlined_call_operand.vmem [shape: bf16[512,256], index: 8, kind: input, shape index: {}]
  %s9 = inlined_call_operand.vmem [shape: f32[1,256], index: 9, kind: input, shape index: {}]
  %s10 = inlined_call_operand.vmem [shape: bf16[32,256], index: 10, kind: input, shape index: {}]
  %s11 = inlined_call_operand.vmem [shape: f32[1,256], index: 11, kind: input, shape index: {}]
  %s12 = inlined_call_operand.vmem [shape: f32[1,256], index: 12, kind: input, shape index: {}]
  %s13 = inlined_call_operand.vmem [shape: bf16[256,128], index: 13, kind: input, shape index: {}]
  %s14 = inlined_call_operand.vmem [shape: f32[1,128], index: 14, kind: input, shape index: {}]
  %s15 = inlined_call_operand.vmem [shape: bf16[256,128], index: 15, kind: input, shape index: {}]
  %s16 = inlined_call_operand.vmem [shape: bf16[128,128], index: 16, kind: input, shape index: {}]
  %s17 = inlined_call_operand.vmem [shape: bf16[4,128], index: 17, kind: input, shape index: {}]
  %s18 = inlined_call_operand.vmem [shape: f32[1,128], index: 18, kind: input, shape index: {}]
  %s19 = inlined_call_operand.vmem [shape: bf16[128,128], index: 19, kind: input, shape index: {}]
  %s20 = inlined_call_operand.vmem [shape: f32[1,128], index: 20, kind: input, shape index: {}]
  %s21 = inlined_call_operand.vmem [shape: bf16[128,128], index: 21, kind: input, shape index: {}]
  %s22 = inlined_call_operand.vmem [shape: f32[1,128], index: 22, kind: input, shape index: {}]
  %s23 = inlined_call_operand.vmem [shape: f32[8,128], index: 23, kind: output, shape index: {}]
  %s24 = sld [smem:[#allocation0]]
  $region102: #{_encoder_forward_impl.1} parent=0
    _
  %s26 = ssub.s32 1, %s24
  %s27 = scalar_select 0, %s26, %s24
  // Predicated region
  $region2: #{_encoder_forward_impl.1} parent=0 // pred_check
    _
  $region3: #{_encoder_forward_impl.1} parent=0 // pred_check_branch
    %29 = sbr.rel (0) target = $region5
  $region4: #{_encoder_forward_impl.1} parent=0 // pred_region
    _
  $region5: #{_encoder_forward_impl.1} parent=0 // pred_fallthru
    _
  // Predicated region
  $region6: #{_encoder_forward_impl.1} parent=0 // pred_check
    _
  $region7: #{_encoder_forward_impl.1} parent=0 // pred_check_branch
    %31 = sbr.rel (0) target = $region9
  $region8: #{_encoder_forward_impl.1} parent=0 // pred_region
    _
  $region9: #{_encoder_forward_impl.1} parent=0 // pred_fallthru
    _
  // Predicated region
  $region10: #{_encoder_forward_impl.1} parent=0 // pred_check
    _
  $region11: #{_encoder_forward_impl.1} parent=0 // pred_check_branch
    %33 = sbr.rel (0) target = $region13
  $region12: #{_encoder_forward_impl.1} parent=0 // pred_region
    _
  $region13: #{_encoder_forward_impl.1} parent=0 // pred_fallthru
    _
  // Predicated region
  $region14: #{_encoder_forward_impl.1} parent=0 // pred_check
    _
  $region15: #{_encoder_forward_impl.1} parent=0 // pred_check_branch
    %35 = sbr.rel (0) target = $region17
  $region16: #{_encoder_forward_impl.1} parent=0 // pred_region
    _
  $region17: #{_encoder_forward_impl.1} parent=0 // pred_fallthru
    _
  // Predicated region
  $region18: #{_encoder_forward_impl.1} parent=0 // pred_check
    _
  $region19: #{_encoder_forward_impl.1} parent=0 // pred_check_branch
    %37 = sbr.rel (0) target = $region21
  $region20: #{_encoder_forward_impl.1} parent=0 // pred_region
    _
  $region21: #{_encoder_forward_impl.1} parent=0 // pred_fallthru
    _
  // Predicated region
  $region22: #{_encoder_forward_impl.1} parent=0 // pred_check
    _
  $region23: #{_encoder_forward_impl.1} parent=0 // pred_check_branch
    %39 = sbr.rel (0) target = $region25
  $region24: #{_encoder_forward_impl.1} parent=0 // pred_region
    _
  $region25: #{_encoder_forward_impl.1} parent=0 // pred_fallthru
    _
  // Predicated region
  $region26: #{_encoder_forward_impl.1} parent=0 // pred_check
    _
  $region27: #{_encoder_forward_impl.1} parent=0 // pred_check_branch
    %41 = sbr.rel (0) target = $region29
  $region28: #{_encoder_forward_impl.1} parent=0 // pred_region
    _
  $region29: #{_encoder_forward_impl.1} parent=0 // pred_fallthru
    _
  // Predicated region
  $region30: #{_encoder_forward_impl.1} parent=0 // pred_check
    _
  $region31: #{_encoder_forward_impl.1} parent=0 // pred_check_branch
    %43 = sbr.rel (0) target = $region33
  $region32: #{_encoder_forward_impl.1} parent=0 // pred_region
    _
  $region33: #{_encoder_forward_impl.1} parent=0 // pred_fallthru
    _
  // Predicated region
  $region34: #{_encoder_forward_impl.1} parent=0 // pred_check
    _
  $region35: #{_encoder_forward_impl.1} parent=0 // pred_check_branch
    %45 = sbr.rel (0) target = $region37
  $region36: #{_encoder_forward_impl.1} parent=0 // pred_region
    _
  $region37: #{_encoder_forward_impl.1} parent=0 // pred_fallthru
    _
  // Predicated region
  $region38: #{_encoder_forward_impl.1} parent=0 // pred_check
    _
  $region39: #{_encoder_forward_impl.1} parent=0 // pred_check_branch
    %47 = sbr.rel (0) target = $region41
  $region40: #{_encoder_forward_impl.1} parent=0 // pred_region
    _
  $region41: #{_encoder_forward_impl.1} parent=0 // pred_fallthru
    _
  // Predicated region
  $region42: #{_encoder_forward_impl.1} parent=0 // pred_check
    _
  $region43: #{_encoder_forward_impl.1} parent=0 // pred_check_branch
    %49 = sbr.rel (0) target = $region45
  $region44: #{_encoder_forward_impl.1} parent=0 // pred_region
    _
  $region45: #{_encoder_forward_impl.1} parent=0 // pred_fallthru
    _
  // Predicated region
  $region46: #{_encoder_forward_impl.1} parent=0 // pred_check
    _
  $region47: #{_encoder_forward_impl.1} parent=0 // pred_check_branch
    %51 = sbr.rel (0) target = $region49
  $region48: #{_encoder_forward_impl.1} parent=0 // pred_region
    _
  $region49: #{_encoder_forward_impl.1} parent=0 // pred_fallthru
    _
  // Predicated region
  $region50: #{_encoder_forward_impl.1} parent=0 // pred_check
    _
  $region51: #{_encoder_forward_impl.1} parent=0 // pred_check_branch
    %53 = sbr.rel (0) target = $region53
  $region52: #{_encoder_forward_impl.1} parent=0 // pred_region
    _
  $region53: #{_encoder_forward_impl.1} parent=0 // pred_fallthru
    _
  // Predicated region
  $region54: #{_encoder_forward_impl.1} parent=0 // pred_check
    _
  $region55: #{_encoder_forward_impl.1} parent=0 // pred_check_branch
    %55 = sbr.rel (0) target = $region57
  $region56: #{_encoder_forward_impl.1} parent=0 // pred_region
    _
  $region57: #{_encoder_forward_impl.1} parent=0 // pred_fallthru
    _
  // Predicated region
  $region58: #{_encoder_forward_impl.1} parent=0 // pred_check
    _
  $region59: #{_encoder_forward_impl.1} parent=0 // pred_check_branch
    %57 = sbr.rel (0) target = $region61
  $region60: #{_encoder_forward_impl.1} parent=0 // pred_region
    _
  $region61: #{_encoder_forward_impl.1} parent=0 // pred_fallthru
    _
  // Predicated region
  $region62: #{_encoder_forward_impl.1} parent=0 // pred_check
    _
  $region63: #{_encoder_forward_impl.1} parent=0 // pred_check_branch
    %59 = sbr.rel (0) target = $region65
  $region64: #{_encoder_forward_impl.1} parent=0 // pred_region
    _
  $region65: #{_encoder_forward_impl.1} parent=0 // pred_fallthru
    _
  // Predicated region
  $region66: #{_encoder_forward_impl.1} parent=0 // pred_check
    _
  $region67: #{_encoder_forward_impl.1} parent=0 // pred_check_branch
    %61 = sbr.rel (0) target = $region69
  $region68: #{_encoder_forward_impl.1} parent=0 // pred_region
    _
  $region69: #{_encoder_forward_impl.1} parent=0 // pred_fallthru
    _
  // Predicated region
  $region70: #{_encoder_forward_impl.1} parent=0 // pred_check
    _
  $region71: #{_encoder_forward_impl.1} parent=0 // pred_check_branch
    %63 = sbr.rel (0) target = $region73
  $region72: #{_encoder_forward_impl.1} parent=0 // pred_region
    _
  $region73: #{_encoder_forward_impl.1} parent=0 // pred_fallthru
    _
  // Predicated region
  $region74: #{_encoder_forward_impl.1} parent=0 // pred_check
    _
  $region75: #{_encoder_forward_impl.1} parent=0 // pred_check_branch
    %65 = sbr.rel (0) target = $region77
  $region76: #{_encoder_forward_impl.1} parent=0 // pred_region
    _
  $region77: #{_encoder_forward_impl.1} parent=0 // pred_fallthru
    _
  // Predicated region
  $region78: #{_encoder_forward_impl.1} parent=0 // pred_check
    _
  $region79: #{_encoder_forward_impl.1} parent=0 // pred_check_branch
    %67 = sbr.rel (0) target = $region81
  $region80: #{_encoder_forward_impl.1} parent=0 // pred_region
    _
  $region81: #{_encoder_forward_impl.1} parent=0 // pred_fallthru
    _
  // Predicated region
  $region82: #{_encoder_forward_impl.1} parent=0 // pred_check
    _
  $region83: #{_encoder_forward_impl.1} parent=0 // pred_check_branch
    %69 = sbr.rel (0) target = $region85
  $region84: #{_encoder_forward_impl.1} parent=0 // pred_region
    _
  $region85: #{_encoder_forward_impl.1} parent=0 // pred_fallthru
    _
  // Predicated region
  $region86: #{_encoder_forward_impl.1} parent=0 // pred_check
    _
  $region87: #{_encoder_forward_impl.1} parent=0 // pred_check_branch
    %71 = sbr.rel (0) target = $region89
  $region88: #{_encoder_forward_impl.1} parent=0 // pred_region
    _
  $region89: #{_encoder_forward_impl.1} parent=0 // pred_fallthru
    _
  // Predicated region
  $region90: #{_encoder_forward_impl.1} parent=0 // pred_check
    _
  $region91: #{_encoder_forward_impl.1} parent=0 // pred_check_branch
    %73 = sbr.rel (0) target = $region93
  $region92: #{_encoder_forward_impl.1} parent=0 // pred_region
    _
  $region93: #{_encoder_forward_impl.1} parent=0 // pred_fallthru
    _
  %v75 = vld [vmem:[%s0] sm:$0xf]
  %v76 = vld [vmem:[%s4] sm:$0xff]
  %v77 = vld [vmem:[%s4 + $0x8] sm:$0xff]
  %v78 = vld [vmem:[%s4 + $0x10] sm:$0xff]
  %v79 = vld [vmem:[%s4 + $0x18] sm:$0xff]
  %v80 = vld [vmem:[%s4 + $0x20] sm:$0xff]
  %v81 = vld [vmem:[%s4 + $0x28] sm:$0xff]
  %v82 = vld [vmem:[%s4 + $0x30] sm:$0xff]
  %v83 = vld [vmem:[%s4 + $0x38] sm:$0xff]
  %v84 = vld [vmem:[%s1] sm:$0xf]
  %v85 = vld [vmem:[%s5] sm:$0xff]
  %v86 = vld [vmem:[%s5 + $0x8] sm:$0xff]
  %v87 = vld [vmem:[%s5 + $0x10] sm:$0xff]
  %v88 = vld [vmem:[%s5 + $0x18] sm:$0xff]
  %v89 = vld [vmem:[%s5 + $0x20] sm:$0xff]
  %v90 = vld [vmem:[%s5 + $0x28] sm:$0xff]
  %v91 = vld [vmem:[%s5 + $0x30] sm:$0xff]
  %v92 = vld [vmem:[%s5 + $0x38] sm:$0xff]
  %v101 = vunpack.c.l.b16 %v85
  %v102 = vunpack.c.h.b16 %v85
  %v103 = vunpack.c.l.b16 %v86
  %v104 = vunpack.c.h.b16 %v86
  %v105 = vunpack.c.l.b16 %v87
  %v106 = vunpack.c.h.b16 %v87
  %v107 = vunpack.c.l.b16 %v88
  %v108 = vunpack.c.h.b16 %v88
  %v109 = vunpack.c.l.b16 %v89
  %v110 = vunpack.c.h.b16 %v89
  %v111 = vunpack.c.l.b16 %v90
  %v112 = vunpack.c.h.b16 %v90
  %v113 = vunpack.c.l.b16 %v91
  %v114 = vunpack.c.h.b16 %v91
  %v115 = vunpack.c.l.b16 %v92
  %v116 = vunpack.c.h.b16 %v92
  %v117 = vpack.c.b16 %v105, %v101
  %v118 = vpack.c.b16 %v106, %v102
  %v119 = vpack.c.b16 %v107, %v103
  %v120 = vpack.c.b16 %v108, %v104
  %v121 = vpack.c.b16 %v113, %v109
  %v122 = vpack.c.b16 %v114, %v110
  %v123 = vpack.c.b16 %v115, %v111
  %v124 = vpack.c.b16 %v116, %v112
  %vm133 = vcmask 261120
  %v135 = vsel %vm133, %v84, 0
  %137 = vmatprep.subr.bf16.mxu0 0
  %138 = vmatpush1.bf16.msra.mxu0 0
  %139 = vmatprep.subr.bf16.mxu0 0
  %140 = vmatpush1.bf16.msra.mxu0 0
  %141 = vmatprep.subr.bf16.mxu0 0
  %142 = vmatpush1.bf16.msra.mxu0 0
  %143 = vmatprep.subr.bf16.mxu0 0
  %144 = vmatpush1.bf16.msra.mxu0 0
  %145 = vmatprep.subr.bf16.mxu0 0
  %146 = vmatpush1.bf16.msra.mxu0 0
  %147 = vmatprep.subr.bf16.mxu0 0
  %148 = vmatpush1.bf16.msra.mxu0 0
  %149 = vmatprep.subr.bf16.mxu0 %v122
  %150 = vmatpush1.bf16.msra.mxu0 %v121
  %151 = vmatprep.subr.bf16.mxu0 %v118
  %152 = vmatpush1.bf16.msra.mxu0 %v117
  %153 = vmatprep.subr.bf16.mxu0 0
  %154 = vmatpush2.bf16.msra.mxu0 0
  %155 = vmatprep.subr.bf16.mxu0 0
  %156 = vmatpush2.bf16.msra.mxu0 0
  %157 = vmatprep.subr.bf16.mxu0 0
  %158 = vmatpush2.bf16.msra.mxu0 0
  %159 = vmatprep.subr.bf16.mxu0 0
  %160 = vmatpush2.bf16.msra.mxu0 0
  %161 = vmatprep.subr.bf16.mxu0 0
  %162 = vmatpush2.bf16.msra.mxu0 0
  %163 = vmatprep.subr.bf16.mxu0 0
  %164 = vmatpush2.bf16.msra.mxu0 0
  %165 = vmatprep.subr.bf16.mxu0 0
  %166 = vmatpush2.bf16.msra.mxu0 0
  %167 = vmatprep.subr.bf16.mxu0 0
  %168 = vmatpush2.bf16.msra.mxu0 0
  %169 = vmatprep.mubr.bf16.mxu0 0
  %170 = vmatmul.mubr.bf16.gmra.mxu0 %v135
  %v171 = vpop.f32.mrf.mxu0
  %v172 = vadd.f32 0.0, %v171
  %v173 = vpop.f32.mrf.mxu0
  %v174 = vadd.f32 0.0, %v173
  %v175 = vpop.f32.mrf.mxu0
  %v176 = vpop.f32.mrf.mxu0
  %177 = vdwg.mxu0
  %178 = vmatprep.subr.bf16.mxu0 0
  %179 = vmatpush1.bf16.msra.mxu0 0
  %180 = vmatprep.subr.bf16.mxu0 0
  %181 = vmatpush1.bf16.msra.mxu0 0
  %182 = vmatprep.subr.bf16.mxu0 0
  %183 = vmatpush1.bf16.msra.mxu0 0
  %184 = vmatprep.subr.bf16.mxu0 0
  %185 = vmatpush1.bf16.msra.mxu0 0
  %186 = vmatprep.subr.bf16.mxu0 0
  %187 = vmatpush1.bf16.msra.mxu0 0
  %188 = vmatprep.subr.bf16.mxu0 0
  %189 = vmatpush1.bf16.msra.mxu0 0
  %190 = vmatprep.subr.bf16.mxu0 %v124
  %191 = vmatpush1.bf16.msra.mxu0 %v123
  %192 = vmatprep.subr.bf16.mxu0 %v120
  %193 = vmatpush1.bf16.msra.mxu0 %v119
  %194 = vmatprep.subr.bf16.mxu0 0
  %195 = vmatpush2.bf16.msra.mxu0 0
  %196 = vmatprep.subr.bf16.mxu0 0
  %197 = vmatpush2.bf16.msra.mxu0 0
  %198 = vmatprep.subr.bf16.mxu0 0
  %199 = vmatpush2.bf16.msra.mxu0 0
  %200 = vmatprep.subr.bf16.mxu0 0
  %201 = vmatpush2.bf16.msra.mxu0 0
  %202 = vmatprep.subr.bf16.mxu0 0
  %203 = vmatpush2.bf16.msra.mxu0 0
  %204 = vmatprep.subr.bf16.mxu0 0
  %205 = vmatpush2.bf16.msra.mxu0 0
  %206 = vmatprep.subr.bf16.mxu0 0
  %207 = vmatpush2.bf16.msra.mxu0 0
  %208 = vmatprep.subr.bf16.mxu0 0
  %209 = vmatpush2.bf16.msra.mxu0 0
  %210 = vmatprep.mubr.bf16.mxu0 0
  %211 = vmatmul.mubr.bf16.gmra.mxu0 %v135
  %v212 = vpop.f32.mrf.mxu0
  %v213 = vadd.f32 0.0, %v212
  %v214 = vpop.f32.mrf.mxu0
  %v215 = vadd.f32 0.0, %v214
  %v216 = vpop.f32.mrf.mxu0
  %v217 = vpop.f32.mrf.mxu0
  %218 = vdwg.mxu0
  %v227 = vunpack.c.l.b16 %v76
  %v228 = vunpack.c.h.b16 %v76
  %v229 = vunpack.c.l.b16 %v77
  %v230 = vunpack.c.h.b16 %v77
  %v231 = vunpack.c.l.b16 %v78
  %v232 = vunpack.c.h.b16 %v78
  %v233 = vunpack.c.l.b16 %v79
  %v234 = vunpack.c.h.b16 %v79
  %v235 = vunpack.c.l.b16 %v80
  %v236 = vunpack.c.h.b16 %v80
  %v237 = vunpack.c.l.b16 %v81
  %v238 = vunpack.c.h.b16 %v81
  %v239 = vunpack.c.l.b16 %v82
  %v240 = vunpack.c.h.b16 %v82
  %v241 = vunpack.c.l.b16 %v83
  %v242 = vunpack.c.h.b16 %v83
  %v243 = vpack.c.b16 %v231, %v227
  %v244 = vpack.c.b16 %v232, %v228
  %v245 = vpack.c.b16 %v233, %v229
  %v246 = vpack.c.b16 %v234, %v230
  %v247 = vpack.c.b16 %v239, %v235
  %v248 = vpack.c.b16 %v240, %v236
  %v249 = vpack.c.b16 %v241, %v237
  %v250 = vpack.c.b16 %v242, %v238
  %v260 = vsel %vm133, %v75, 0
  %262 = vmatprep.subr.bf16.mxu0 0
  %263 = vmatpush1.bf16.msra.mxu0 0
  %264 = vmatprep.subr.bf16.mxu0 0
  %265 = vmatpush1.bf16.msra.mxu0 0
  %266 = vmatprep.subr.bf16.mxu0 0
  %267 = vmatpush1.bf16.msra.mxu0 0
  %268 = vmatprep.subr.bf16.mxu0 0
  %269 = vmatpush1.bf16.msra.mxu0 0
  %270 = vmatprep.subr.bf16.mxu0 0
  %271 = vmatpush1.bf16.msra.mxu0 0
  %272 = vmatprep.subr.bf16.mxu0 0
  %273 = vmatpush1.bf16.msra.mxu0 0
  %274 = vmatprep.subr.bf16.mxu0 %v248
  %275 = vmatpush1.bf16.msra.mxu0 %v247
  %276 = vmatprep.subr.bf16.mxu0 %v244
  %277 = vmatpush1.bf16.msra.mxu0 %v243
  %278 = vmatprep.subr.bf16.mxu0 0
  %279 = vmatpush2.bf16.msra.mxu0 0
  %280 = vmatprep.subr.bf16.mxu0 0
  %281 = vmatpush2.bf16.msra.mxu0 0
  %282 = vmatprep.subr.bf16.mxu0 0
  %283 = vmatpush2.bf16.msra.mxu0 0
  %284 = vmatprep.subr.bf16.mxu0 0
  %285 = vmatpush2.bf16.msra.mxu0 0
  %286 = vmatprep.subr.bf16.mxu0 0
  %287 = vmatpush2.bf16.msra.mxu0 0
  %288 = vmatprep.subr.bf16.mxu0 0
  %289 = vmatpush2.bf16.msra.mxu0 0
  %290 = vmatprep.subr.bf16.mxu0 0
  %291 = vmatpush2.bf16.msra.mxu0 0
  %292 = vmatprep.subr.bf16.mxu0 0
  %293 = vmatpush2.bf16.msra.mxu0 0
  %294 = vmatprep.mubr.bf16.mxu0 0
  %295 = vmatmul.mubr.bf16.gmra.mxu0 %v260
  %v296 = vpop.f32.mrf.mxu0
  %v297 = vadd.f32 %v172, %v296
  %v298 = vpop.f32.mrf.mxu0
  %v299 = vadd.f32 %v174, %v298
  %v300 = vpop.f32.mrf.mxu0
  %v301 = vpop.f32.mrf.mxu0
  %302 = vdwg.mxu0
  %303 = vmatprep.subr.bf16.mxu0 0
  %304 = vmatpush1.bf16.msra.mxu0 0
  %305 = vmatprep.subr.bf16.mxu0 0
  %306 = vmatpush1.bf16.msra.mxu0 0
  %307 = vmatprep.subr.bf16.mxu0 0
  %308 = vmatpush1.bf16.msra.mxu0 0
  %309 = vmatprep.subr.bf16.mxu0 0
  %310 = vmatpush1.bf16.msra.mxu0 0
  %311 = vmatprep.subr.bf16.mxu0 0
  %312 = vmatpush1.bf16.msra.mxu0 0
  %313 = vmatprep.subr.bf16.mxu0 0
  %314 = vmatpush1.bf16.msra.mxu0 0
  %315 = vmatprep.subr.bf16.mxu0 %v250
  %316 = vmatpush1.bf16.msra.mxu0 %v249
  %317 = vmatprep.subr.bf16.mxu0 %v246
  %318 = vmatpush1.bf16.msra.mxu0 %v245
  %319 = vmatprep.subr.bf16.mxu0 0
  %320 = vmatpush2.bf16.msra.mxu0 0
  %321 = vmatprep.subr.bf16.mxu0 0
  %322 = vmatpush2.bf16.msra.mxu0 0
  %323 = vmatprep.subr.bf16.mxu0 0
  %324 = vmatpush2.bf16.msra.mxu0 0
  %325 = vmatprep.subr.bf16.mxu0 0
  %326 = vmatpush2.bf16.msra.mxu0 0
  %327 = vmatprep.subr.bf16.mxu0 0
  %328 = vmatpush2.bf16.msra.mxu0 0
  %329 = vmatprep.subr.bf16.mxu0 0
  %330 = vmatpush2.bf16.msra.mxu0 0
  %331 = vmatprep.subr.bf16.mxu0 0
  %332 = vmatpush2.bf16.msra.mxu0 0
  %333 = vmatprep.subr.bf16.mxu0 0
  %334 = vmatpush2.bf16.msra.mxu0 0
  %335 = vmatprep.mubr.bf16.mxu0 0
  %336 = vmatmul.mubr.bf16.gmra.mxu0 %v260
  %v337 = vpop.f32.mrf.mxu0
  %v338 = vadd.f32 %v213, %v337
  %v339 = vpop.f32.mrf.mxu0
  %v340 = vadd.f32 %v215, %v339
  %v341 = vpop.f32.mrf.mxu0
  %v342 = vpop.f32.mrf.mxu0
  %343 = vdwg.mxu0
  %v344 = vld [vmem:[%s6] sm:$0xf]
  %v345 = vld [vmem:[%s7] sm:$0xf]
  %v346 = vrot.slane %v297, 4
  %v347 = vadd.f32 %v297, %v346
  %v348 = vrot.slane %v347, 2
  %v349 = vadd.f32 %v347, %v348
  %v350 = vrot.slane %v349, 1
  %v351 = vadd.f32 %v349, %v350
  %v352 = vrot.slane %v299, 4
  %v353 = vadd.f32 %v299, %v352
  %v354 = vrot.slane %v353, 2
  %v355 = vadd.f32 %v353, %v354
  %v356 = vrot.slane %v355, 1
  %v357 = vadd.f32 %v355, %v356
  %v358 = vrot.slane %v338, 4
  %v359 = vadd.f32 %v338, %v358
  %v360 = vrot.slane %v359, 2
  %v361 = vadd.f32 %v359, %v360
  %v362 = vrot.slane %v361, 1
  %v363 = vadd.f32 %v361, %v362
  %v364 = vrot.slane %v340, 4
  %v365 = vadd.f32 %v340, %v364
  %v366 = vrot.slane %v365, 2
  %v367 = vadd.f32 %v365, %v366
  %v368 = vrot.slane %v367, 1
  %v369 = vadd.f32 %v367, %v368
  %v370 = vrcp.pop 8.0
  %v371 = vmul.f32 %v351, %v370
  %v372 = vmul.f32 %v357, %v370
  %v373 = vmul.f32 %v363, %v370
  %v374 = vmul.f32 %v369, %v370
  %v375 = vsub.f32 %v297, %v371
  %v376 = vsub.f32 %v299, %v372
  %v377 = vsub.f32 %v338, %v373
  %v378 = vsub.f32 %v340, %v374
  %v379 = vmul.f32 %v375, %v375
  %v380 = vmul.f32 %v376, %v376
  %v381 = vmul.f32 %v377, %v377
  %v382 = vmul.f32 %v378, %v378
  %v383 = vrot.slane %v379, 4
  %v384 = vadd.f32 %v379, %v383
  %v385 = vrot.slane %v384, 2
  %v386 = vadd.f32 %v384, %v385
  %v387 = vrot.slane %v386, 1
  %v388 = vadd.f32 %v386, %v387
  %v389 = vrot.slane %v380, 4
  %v390 = vadd.f32 %v380, %v389
  %v391 = vrot.slane %v390, 2
  %v392 = vadd.f32 %v390, %v391
  %v393 = vrot.slane %v392, 1
  %v394 = vadd.f32 %v392, %v393
  %v395 = vrot.slane %v381, 4
  %v396 = vadd.f32 %v381, %v395
  %v397 = vrot.slane %v396, 2
  %v398 = vadd.f32 %v396, %v397
  %v399 = vrot.slane %v398, 1
  %v400 = vadd.f32 %v398, %v399
  %v401 = vrot.slane %v382, 4
  %v402 = vadd.f32 %v382, %v401
  %v403 = vrot.slane %v402, 2
  %v404 = vadd.f32 %v402, %v403
  %v405 = vrot.slane %v404, 1
  %v406 = vadd.f32 %v404, %v405
  %v407 = vmul.f32 %v388, %v370
  %v408 = vmul.f32 %v394, %v370
  %v409 = vmul.f32 %v400, %v370
  %v410 = vmul.f32 %v406, %v370
  %v411 = vadd.f32 %v407, 1e-05
  %v412 = vadd.f32 %v408, 1e-05
  %v413 = vadd.f32 %v409, 1e-05
  %v414 = vadd.f32 %v410, 1e-05
  %v415 = vrsqrt.pop %v411
  %v416 = vrsqrt.pop %v412
  %v417 = vrsqrt.pop %v413
  %v418 = vrsqrt.pop %v414
  %v419 = vmul.f32 %v375, %v415
  %v420 = vmul.f32 %v376, %v416
  %v421 = vmul.f32 %v377, %v417
  %v422 = vmul.f32 %v378, %v418
  %v424 = vlaneseq
  %v425 = vshrl.u32 %v424, 7
  %v426 = vsub.s32 0, %v425
  %v427 = vrot.slane %v344, %v426
  %v428 = vlaneseq
  %v429 = vshrl.u32 %v428, 7
  %v430 = vsub.s32 1, %v429
  %v431 = vrot.slane %v344, %v430
  %v432 = vlaneseq
  %v433 = vshrl.u32 %v432, 7
  %v434 = vsub.s32 2, %v433
  %v435 = vrot.slane %v344, %v434
  %v436 = vlaneseq
  %v437 = vshrl.u32 %v436, 7
  %v438 = vsub.s32 3, %v437
  %v439 = vrot.slane %v344, %v438
  %v444 = vmul.f32 %v419, %v427
  %v445 = vmul.f32 %v420, %v431
  %v446 = vmul.f32 %v421, %v435
  %v447 = vmul.f32 %v422, %v439
  %v449 = vlaneseq
  %v450 = vshrl.u32 %v449, 7
  %v451 = vsub.s32 0, %v450
  %v452 = vrot.slane %v345, %v451
  %v453 = vlaneseq
  %v454 = vshrl.u32 %v453, 7
  %v455 = vsub.s32 1, %v454
  %v456 = vrot.slane %v345, %v455
  %v457 = vlaneseq
  %v458 = vshrl.u32 %v457, 7
  %v459 = vsub.s32 2, %v458
  %v460 = vrot.slane %v345, %v459
  %v461 = vlaneseq
  %v462 = vshrl.u32 %v461, 7
  %v463 = vsub.s32 3, %v462
  %v464 = vrot.slane %v345, %v463
  %v469 = vadd.f32 %v444, %v452
  %v470 = vadd.f32 %v445, %v456
  %v471 = vadd.f32 %v446, %v460
  %v472 = vadd.f32 %v447, %v464
  %v473 = vmax.f32 %v469, 0.0
  %v474 = vmax.f32 %v470, 0.0
  %v475 = vmax.f32 %v471, 0.0
  %v476 = vmax.f32 %v472, 0.0
  %v477 = vpack.c.bf16 %v473, %v473
  %v478 = vpack.c.bf16 %v474, %v474
  %v479 = vpack.c.bf16 %v475, %v475
  %v480 = vpack.c.bf16 %v476, %v476
  %v481 = vld [vmem:[%s8] sm:$0xff]
  %v482 = vld [vmem:[%s8 + $0x8] sm:$0xff]
  %v483 = vld [vmem:[%s8 + $0x10] sm:$0xff]
  %v484 = vld [vmem:[%s8 + $0x18] sm:$0xff]
  %v485 = vld [vmem:[%s8 + $0x20] sm:$0xff]
  %v486 = vld [vmem:[%s8 + $0x28] sm:$0xff]
  %v487 = vld [vmem:[%s8 + $0x30] sm:$0xff]
  %v488 = vld [vmem:[%s8 + $0x38] sm:$0xff]
  %v489 = vld [vmem:[%s8 + $0x40] sm:$0xff]
  %v490 = vld [vmem:[%s8 + $0x48] sm:$0xff]
  %v491 = vld [vmem:[%s8 + $0x50] sm:$0xff]
  %v492 = vld [vmem:[%s8 + $0x58] sm:$0xff]
  %v493 = vld [vmem:[%s8 + $0x60] sm:$0xff]
  %v494 = vld [vmem:[%s8 + $0x68] sm:$0xff]
  %v495 = vld [vmem:[%s8 + $0x70] sm:$0xff]
  %v496 = vld [vmem:[%s8 + $0x78] sm:$0xff]
  %v497 = vld [vmem:[%s8 + $0x80] sm:$0xff]
  %v498 = vld [vmem:[%s8 + $0x88] sm:$0xff]
  %v499 = vld [vmem:[%s8 + $0x90] sm:$0xff]
  %v500 = vld [vmem:[%s8 + $0x98] sm:$0xff]
  %v501 = vld [vmem:[%s8 + $0xa0] sm:$0xff]
  %v502 = vld [vmem:[%s8 + $0xa8] sm:$0xff]
  %v503 = vld [vmem:[%s8 + $0xb0] sm:$0xff]
  %v504 = vld [vmem:[%s8 + $0xb8] sm:$0xff]
  %v505 = vld [vmem:[%s8 + $0xc0] sm:$0xff]
  %v506 = vld [vmem:[%s8 + $0xc8] sm:$0xff]
  %v507 = vld [vmem:[%s8 + $0xd0] sm:$0xff]
  %v508 = vld [vmem:[%s8 + $0xd8] sm:$0xff]
  %v509 = vld [vmem:[%s8 + $0xe0] sm:$0xff]
  %v510 = vld [vmem:[%s8 + $0xe8] sm:$0xff]
  %v511 = vld [vmem:[%s8 + $0xf0] sm:$0xff]
  %v512 = vld [vmem:[%s8 + $0xf8] sm:$0xff]
  %v513 = vld [vmem:[%s8 + $0x100] sm:$0xff]
  %v514 = vld [vmem:[%s8 + $0x108] sm:$0xff]
  %v515 = vld [vmem:[%s8 + $0x110] sm:$0xff]
  %v516 = vld [vmem:[%s8 + $0x118] sm:$0xff]
  %v517 = vld [vmem:[%s8 + $0x120] sm:$0xff]
  %v518 = vld [vmem:[%s8 + $0x128] sm:$0xff]
  %v519 = vld [vmem:[%s8 + $0x130] sm:$0xff]
  %v520 = vld [vmem:[%s8 + $0x138] sm:$0xff]
  %v521 = vld [vmem:[%s8 + $0x140] sm:$0xff]
  %v522 = vld [vmem:[%s8 + $0x148] sm:$0xff]
  %v523 = vld [vmem:[%s8 + $0x150] sm:$0xff]
  %v524 = vld [vmem:[%s8 + $0x158] sm:$0xff]
  %v525 = vld [vmem:[%s8 + $0x160] sm:$0xff]
  %v526 = vld [vmem:[%s8 + $0x168] sm:$0xff]
  %v527 = vld [vmem:[%s8 + $0x170] sm:$0xff]
  %v528 = vld [vmem:[%s8 + $0x178] sm:$0xff]
  %v529 = vld [vmem:[%s8 + $0x180] sm:$0xff]
  %v530 = vld [vmem:[%s8 + $0x188] sm:$0xff]
  %v531 = vld [vmem:[%s8 + $0x190] sm:$0xff]
  %v532 = vld [vmem:[%s8 + $0x198] sm:$0xff]
  %v533 = vld [vmem:[%s8 + $0x1a0] sm:$0xff]
  %v534 = vld [vmem:[%s8 + $0x1a8] sm:$0xff]
  %v535 = vld [vmem:[%s8 + $0x1b0] sm:$0xff]
  %v536 = vld [vmem:[%s8 + $0x1b8] sm:$0xff]
  %v537 = vld [vmem:[%s8 + $0x1c0] sm:$0xff]
  %v538 = vld [vmem:[%s8 + $0x1c8] sm:$0xff]
  %v539 = vld [vmem:[%s8 + $0x1d0] sm:$0xff]
  %v540 = vld [vmem:[%s8 + $0x1d8] sm:$0xff]
  %v541 = vld [vmem:[%s8 + $0x1e0] sm:$0xff]
  %v542 = vld [vmem:[%s8 + $0x1e8] sm:$0xff]
  %v543 = vld [vmem:[%s8 + $0x1f0] sm:$0xff]
  %v544 = vld [vmem:[%s8 + $0x1f8] sm:$0xff]
  %v545 = vld [vmem:[%s9] sm:$0x3]
  %v547 = vlaneseq
  %v548 = vshrl.u32 %v547, 7
  %v549 = vsub.s32 0, %v548
  %v550 = vrot.slane %v545, %v549
  %v551 = vlaneseq
  %v552 = vshrl.u32 %v551, 7
  %v553 = vsub.s32 1, %v552
  %v554 = vrot.slane %v545, %v553
  %v621 = vunpack.c.l.b16 %v481
  %v622 = vunpack.c.h.b16 %v481
  %v623 = vunpack.c.l.b16 %v482
  %v624 = vunpack.c.h.b16 %v482
  %v625 = vunpack.c.l.b16 %v483
  %v626 = vunpack.c.h.b16 %v483
  %v627 = vunpack.c.l.b16 %v484
  %v628 = vunpack.c.h.b16 %v484
  %v629 = vunpack.c.l.b16 %v485
  %v630 = vunpack.c.h.b16 %v485
  %v631 = vunpack.c.l.b16 %v486
  %v632 = vunpack.c.h.b16 %v486
  %v633 = vunpack.c.l.b16 %v487
  %v634 = vunpack.c.h.b16 %v487
  %v635 = vunpack.c.l.b16 %v488
  %v636 = vunpack.c.h.b16 %v488
  %v637 = vunpack.c.l.b16 %v489
  %v638 = vunpack.c.h.b16 %v489
  %v639 = vunpack.c.l.b16 %v490
  %v640 = vunpack.c.h.b16 %v490
  %v641 = vunpack.c.l.b16 %v491
  %v642 = vunpack.c.h.b16 %v491
  %v643 = vunpack.c.l.b16 %v492
  %v644 = vunpack.c.h.b16 %v492
  %v645 = vunpack.c.l.b16 %v493
  %v646 = vunpack.c.h.b16 %v493
  %v647 = vunpack.c.l.b16 %v494
  %v648 = vunpack.c.h.b16 %v494
  %v649 = vunpack.c.l.b16 %v495
  %v650 = vunpack.c.h.b16 %v495
  %v651 = vunpack.c.l.b16 %v496
  %v652 = vunpack.c.h.b16 %v496
  %v653 = vunpack.c.l.b16 %v497
  %v654 = vunpack.c.h.b16 %v497
  %v655 = vunpack.c.l.b16 %v498
  %v656 = vunpack.c.h.b16 %v498
  %v657 = vunpack.c.l.b16 %v499
  %v658 = vunpack.c.h.b16 %v499
  %v659 = vunpack.c.l.b16 %v500
  %v660 = vunpack.c.h.b16 %v500
  %v661 = vunpack.c.l.b16 %v501
  %v662 = vunpack.c.h.b16 %v501
  %v663 = vunpack.c.l.b16 %v502
  %v664 = vunpack.c.h.b16 %v502
  %v665 = vunpack.c.l.b16 %v503
  %v666 = vunpack.c.h.b16 %v503
  %v667 = vunpack.c.l.b16 %v504
  %v668 = vunpack.c.h.b16 %v504
  %v669 = vunpack.c.l.b16 %v505
  %v670 = vunpack.c.h.b16 %v505
  %v671 = vunpack.c.l.b16 %v506
  %v672 = vunpack.c.h.b16 %v506
  %v673 = vunpack.c.l.b16 %v507
  %v674 = vunpack.c.h.b16 %v507
  %v675 = vunpack.c.l.b16 %v508
  %v676 = vunpack.c.h.b16 %v508
  %v677 = vunpack.c.l.b16 %v509
  %v678 = vunpack.c.h.b16 %v509
  %v679 = vunpack.c.l.b16 %v510
  %v680 = vunpack.c.h.b16 %v510
  %v681 = vunpack.c.l.b16 %v511
  %v682 = vunpack.c.h.b16 %v511
  %v683 = vunpack.c.l.b16 %v512
  %v684 = vunpack.c.h.b16 %v512
  %v685 = vunpack.c.l.b16 %v513
  %v686 = vunpack.c.h.b16 %v513
  %v687 = vunpack.c.l.b16 %v514
  %v688 = vunpack.c.h.b16 %v514
  %v689 = vunpack.c.l.b16 %v515
  %v690 = vunpack.c.h.b16 %v515
  %v691 = vunpack.c.l.b16 %v516
  %v692 = vunpack.c.h.b16 %v516
  %v693 = vunpack.c.l.b16 %v517
  %v694 = vunpack.c.h.b16 %v517
  %v695 = vunpack.c.l.b16 %v518
  %v696 = vunpack.c.h.b16 %v518
  %v697 = vunpack.c.l.b16 %v519
  %v698 = vunpack.c.h.b16 %v519
  %v699 = vunpack.c.l.b16 %v520
  %v700 = vunpack.c.h.b16 %v520
  %v701 = vunpack.c.l.b16 %v521
  %v702 = vunpack.c.h.b16 %v521
  %v703 = vunpack.c.l.b16 %v522
  %v704 = vunpack.c.h.b16 %v522
  %v705 = vunpack.c.l.b16 %v523
  %v706 = vunpack.c.h.b16 %v523
  %v707 = vunpack.c.l.b16 %v524
  %v708 = vunpack.c.h.b16 %v524
  %v709 = vunpack.c.l.b16 %v525
  %v710 = vunpack.c.h.b16 %v525
  %v711 = vunpack.c.l.b16 %v526
  %v712 = vunpack.c.h.b16 %v526
  %v713 = vunpack.c.l.b16 %v527
  %v714 = vunpack.c.h.b16 %v527
  %v715 = vunpack.c.l.b16 %v528
  %v716 = vunpack.c.h.b16 %v528
  %v717 = vunpack.c.l.b16 %v529
  %v718 = vunpack.c.h.b16 %v529
  %v719 = vunpack.c.l.b16 %v530
  %v720 = vunpack.c.h.b16 %v530
  %v721 = vunpack.c.l.b16 %v531
  %v722 = vunpack.c.h.b16 %v531
  %v723 = vunpack.c.l.b16 %v532
  %v724 = vunpack.c.h.b16 %v532
  %v725 = vunpack.c.l.b16 %v533
  %v726 = vunpack.c.h.b16 %v533
  %v727 = vunpack.c.l.b16 %v534
  %v728 = vunpack.c.h.b16 %v534
  %v729 = vunpack.c.l.b16 %v535
  %v730 = vunpack.c.h.b16 %v535
  %v731 = vunpack.c.l.b16 %v536
  %v732 = vunpack.c.h.b16 %v536
  %v733 = vunpack.c.l.b16 %v537
  %v734 = vunpack.c.h.b16 %v537
  %v735 = vunpack.c.l.b16 %v538
  %v736 = vunpack.c.h.b16 %v538
  %v737 = vunpack.c.l.b16 %v539
  %v738 = vunpack.c.h.b16 %v539
  %v739 = vunpack.c.l.b16 %v540
  %v740 = vunpack.c.h.b16 %v540
  %v741 = vunpack.c.l.b16 %v541
  %v742 = vunpack.c.h.b16 %v541
  %v743 = vunpack.c.l.b16 %v542
  %v744 = vunpack.c.h.b16 %v542
  %v745 = vunpack.c.l.b16 %v543
  %v746 = vunpack.c.h.b16 %v543
  %v747 = vunpack.c.l.b16 %v544
  %v748 = vunpack.c.h.b16 %v544
  %v749 = vpack.c.b16 %v623, %v621
  %v750 = vpack.c.b16 %v624, %v622
  %v751 = vpack.c.b16 %v627, %v625
  %v752 = vpack.c.b16 %v628, %v626
  %v753 = vpack.c.b16 %v631, %v629
  %v754 = vpack.c.b16 %v632, %v630
  %v755 = vpack.c.b16 %v635, %v633
  %v756 = vpack.c.b16 %v636, %v634
  %v757 = vpack.c.b16 %v639, %v637
  %v758 = vpack.c.b16 %v640, %v638
  %v759 = vpack.c.b16 %v643, %v641
  %v760 = vpack.c.b16 %v644, %v642
  %v761 = vpack.c.b16 %v647, %v645
  %v762 = vpack.c.b16 %v648, %v646
  %v763 = vpack.c.b16 %v651, %v649
  %v764 = vpack.c.b16 %v652, %v650
  %v765 = vpack.c.b16 %v655, %v653
  %v766 = vpack.c.b16 %v656, %v654
  %v767 = vpack.c.b16 %v659, %v657
  %v768 = vpack.c.b16 %v660, %v658
  %v769 = vpack.c.b16 %v663, %v661
  %v770 = vpack.c.b16 %v664, %v662
  %v771 = vpack.c.b16 %v667, %v665
  %v772 = vpack.c.b16 %v668, %v666
  %v773 = vpack.c.b16 %v671, %v669
  %v774 = vpack.c.b16 %v672, %v670
  %v775 = vpack.c.b16 %v675, %v673
  %v776 = vpack.c.b16 %v676, %v674
  %v777 = vpack.c.b16 %v679, %v677
  %v778 = vpack.c.b16 %v680, %v678
  %v779 = vpack.c.b16 %v683, %v681
  %v780 = vpack.c.b16 %v684, %v682
  %v781 = vpack.c.b16 %v687, %v685
  %v782 = vpack.c.b16 %v688, %v686
  %v783 = vpack.c.b16 %v691, %v689
  %v784 = vpack.c.b16 %v692, %v690
  %v785 = vpack.c.b16 %v695, %v693
  %v786 = vpack.c.b16 %v696, %v694
  %v787 = vpack.c.b16 %v699, %v697
  %v788 = vpack.c.b16 %v700, %v698
  %v789 = vpack.c.b16 %v703, %v701
  %v790 = vpack.c.b16 %v704, %v702
  %v791 = vpack.c.b16 %v707, %v705
  %v792 = vpack.c.b16 %v708, %v706
  %v793 = vpack.c.b16 %v711, %v709
  %v794 = vpack.c.b16 %v712, %v710
  %v795 = vpack.c.b16 %v715, %v713
  %v796 = vpack.c.b16 %v716, %v714
  %v797 = vpack.c.b16 %v719, %v717
  %v798 = vpack.c.b16 %v720, %v718
  %v799 = vpack.c.b16 %v723, %v721
  %v800 = vpack.c.b16 %v724, %v722
  %v801 = vpack.c.b16 %v727, %v725
  %v802 = vpack.c.b16 %v728, %v726
  %v803 = vpack.c.b16 %v731, %v729
  %v804 = vpack.c.b16 %v732, %v730
  %v805 = vpack.c.b16 %v735, %v733
  %v806 = vpack.c.b16 %v736, %v734
  %v807 = vpack.c.b16 %v739, %v737
  %v808 = vpack.c.b16 %v740, %v738
  %v809 = vpack.c.b16 %v743, %v741
  %v810 = vpack.c.b16 %v744, %v742
  %v811 = vpack.c.b16 %v747, %v745
  %v812 = vpack.c.b16 %v748, %v746
  %877 = vmatprep.subr.bf16.mxu0 %v764
  %878 = vmatpush1.bf16.msra.mxu0 %v763
  %879 = vmatprep.subr.bf16.mxu0 %v762
  %880 = vmatpush1.bf16.msra.mxu0 %v761
  %881 = vmatprep.subr.bf16.mxu0 %v760
  %882 = vmatpush1.bf16.msra.mxu0 %v759
  %883 = vmatprep.subr.bf16.mxu0 %v758
  %884 = vmatpush1.bf16.msra.mxu0 %v757
  %885 = vmatprep.subr.bf16.mxu0 %v756
  %886 = vmatpush1.bf16.msra.mxu0 %v755
  %887 = vmatprep.subr.bf16.mxu0 %v754
  %888 = vmatpush1.bf16.msra.mxu0 %v753
  %889 = vmatprep.subr.bf16.mxu0 %v752
  %890 = vmatpush1.bf16.msra.mxu0 %v751
  %891 = vmatprep.subr.bf16.mxu0 %v750
  %892 = vmatpush1.bf16.msra.mxu0 %v749
  %893 = vmatprep.subr.bf16.mxu0 %v780
  %894 = vmatpush2.bf16.msra.mxu0 %v779
  %895 = vmatprep.subr.bf16.mxu0 %v778
  %896 = vmatpush2.bf16.msra.mxu0 %v777
  %897 = vmatprep.subr.bf16.mxu0 %v776
  %898 = vmatpush2.bf16.msra.mxu0 %v775
  %899 = vmatprep.subr.bf16.mxu0 %v774
  %900 = vmatpush2.bf16.msra.mxu0 %v773
  %901 = vmatprep.subr.bf16.mxu0 %v772
  %902 = vmatpush2.bf16.msra.mxu0 %v771
  %903 = vmatprep.subr.bf16.mxu0 %v770
  %904 = vmatpush2.bf16.msra.mxu0 %v769
  %905 = vmatprep.subr.bf16.mxu0 %v768
  %906 = vmatpush2.bf16.msra.mxu0 %v767
  %907 = vmatprep.subr.bf16.mxu0 %v766
  %908 = vmatpush2.bf16.msra.mxu0 %v765
  %909 = vmatprep.mubr.bf16.mxu0 %v478
  %910 = vmatmul.mubr.bf16.gmra.mxu0 %v477
  %v911 = vpop.f32.mrf.mxu0
  %v912 = vadd.f32 %v550, %v911
  %v913 = vpop.f32.mrf.mxu0
  %v914 = vadd.f32 %v554, %v913
  %v915 = vpop.f32.mrf.mxu0
  %v916 = vpop.f32.mrf.mxu0
  %917 = vdwg.mxu0
  %918 = vmatprep.subr.bf16.mxu0 %v796
  %919 = vmatpush1.bf16.msra.mxu0 %v795
  %920 = vmatprep.subr.bf16.mxu0 %v794
  %921 = vmatpush1.bf16.msra.mxu0 %v793
  %922 = vmatprep.subr.bf16.mxu0 %v792
  %923 = vmatpush1.bf16.msra.mxu0 %v791
  %924 = vmatprep.subr.bf16.mxu0 %v790
  %925 = vmatpush1.bf16.msra.mxu0 %v789
  %926 = vmatprep.subr.bf16.mxu0 %v788
  %927 = vmatpush1.bf16.msra.mxu0 %v787
  %928 = vmatprep.subr.bf16.mxu0 %v786
  %929 = vmatpush1.bf16.msra.mxu0 %v785
  %930 = vmatprep.subr.bf16.mxu0 %v784
  %931 = vmatpush1.bf16.msra.mxu0 %v783
  %932 = vmatprep.subr.bf16.mxu0 %v782
  %933 = vmatpush1.bf16.msra.mxu0 %v781
  %934 = vmatprep.subr.bf16.mxu0 %v812
  %935 = vmatpush2.bf16.msra.mxu0 %v811
  %936 = vmatprep.subr.bf16.mxu0 %v810
  %937 = vmatpush2.bf16.msra.mxu0 %v809
  %938 = vmatprep.subr.bf16.mxu0 %v808
  %939 = vmatpush2.bf16.msra.mxu0 %v807
  %940 = vmatprep.subr.bf16.mxu0 %v806
  %941 = vmatpush2.bf16.msra.mxu0 %v805
  %942 = vmatprep.subr.bf16.mxu0 %v804
  %943 = vmatpush2.bf16.msra.mxu0 %v803
  %944 = vmatprep.subr.bf16.mxu0 %v802
  %945 = vmatpush2.bf16.msra.mxu0 %v801
  %946 = vmatprep.subr.bf16.mxu0 %v800
  %947 = vmatpush2.bf16.msra.mxu0 %v799
  %948 = vmatprep.subr.bf16.mxu0 %v798
  %949 = vmatpush2.bf16.msra.mxu0 %v797
  %950 = vmatprep.mubr.bf16.mxu0 %v480
  %951 = vmatmul.mubr.bf16.gmra.mxu0 %v479
  %v952 = vpop.f32.mrf.mxu0
  %v953 = vadd.f32 %v912, %v952
  %v954 = vpop.f32.mrf.mxu0
  %v955 = vadd.f32 %v914, %v954
  %v956 = vpop.f32.mrf.mxu0
  %v957 = vpop.f32.mrf.mxu0
  %958 = vdwg.mxu0
  %v959 = vmax.f32 %v953, 0.0
  %v960 = vmax.f32 %v955, 0.0
  %v961 = vld [vmem:[%s2] sm:$0xf]
  %v962 = vld [vmem:[%s10] sm:$0xff]
  %v963 = vld [vmem:[%s10 + $0x8] sm:$0xff]
  %v964 = vld [vmem:[%s10 + $0x10] sm:$0xff]
  %v965 = vld [vmem:[%s10 + $0x18] sm:$0xff]
  %v970 = vunpack.c.l.b16 %v962
  %v971 = vunpack.c.h.b16 %v962
  %v972 = vunpack.c.l.b16 %v963
  %v973 = vunpack.c.h.b16 %v963
  %v974 = vunpack.c.l.b16 %v964
  %v975 = vunpack.c.h.b16 %v964
  %v976 = vunpack.c.l.b16 %v965
  %v977 = vunpack.c.h.b16 %v965
  %v978 = vpack.c.b16 %v972, %v970
  %v979 = vpack.c.b16 %v973, %v971
  %v980 = vpack.c.b16 %v976, %v974
  %v981 = vpack.c.b16 %v977, %v975
  %v987 = vsel %vm133, %v961, 0
  %989 = vmatprep.subr.bf16.mxu0 0
  %990 = vmatpush1.bf16.msra.mxu0 0
  %991 = vmatprep.subr.bf16.mxu0 0
  %992 = vmatpush1.bf16.msra.mxu0 0
  %993 = vmatprep.subr.bf16.mxu0 0
  %994 = vmatpush1.bf16.msra.mxu0 0
  %995 = vmatprep.subr.bf16.mxu0 0
  %996 = vmatpush1.bf16.msra.mxu0 0
  %997 = vmatprep.subr.bf16.mxu0 0
  %998 = vmatpush1.bf16.msra.mxu0 0
  %999 = vmatprep.subr.bf16.mxu0 0
  %1000 = vmatpush1.bf16.msra.mxu0 0
  %1001 = vmatprep.subr.bf16.mxu0 %v981
  %1002 = vmatpush1.bf16.msra.mxu0 %v980
  %1003 = vmatprep.subr.bf16.mxu0 %v979
  %1004 = vmatpush1.bf16.msra.mxu0 %v978
  %1005 = vmatprep.subr.bf16.mxu0 0
  %1006 = vmatpush2.bf16.msra.mxu0 0
  %1007 = vmatprep.subr.bf16.mxu0 0
  %1008 = vmatpush2.bf16.msra.mxu0 0
  %1009 = vmatprep.subr.bf16.mxu0 0
  %1010 = vmatpush2.bf16.msra.mxu0 0
  %1011 = vmatprep.subr.bf16.mxu0 0
  %1012 = vmatpush2.bf16.msra.mxu0 0
  %1013 = vmatprep.subr.bf16.mxu0 0
  %1014 = vmatpush2.bf16.msra.mxu0 0
  %1015 = vmatprep.subr.bf16.mxu0 0
  %1016 = vmatpush2.bf16.msra.mxu0 0
  %1017 = vmatprep.subr.bf16.mxu0 0
  %1018 = vmatpush2.bf16.msra.mxu0 0
  %1019 = vmatprep.subr.bf16.mxu0 0
  %1020 = vmatpush2.bf16.msra.mxu0 0
  %1021 = vmatprep.mubr.bf16.mxu0 0
  %1022 = vmatmul.mubr.bf16.gmra.mxu0 %v987
  %v1023 = vpop.f32.mrf.mxu0
  %v1024 = vadd.f32 0.0, %v1023
  %v1025 = vpop.f32.mrf.mxu0
  %v1026 = vadd.f32 0.0, %v1025
  %v1027 = vpop.f32.mrf.mxu0
  %v1028 = vpop.f32.mrf.mxu0
  %1029 = vdwg.mxu0
  %v1030 = vld [vmem:[%s11] sm:$0x3]
  %v1031 = vld [vmem:[%s12] sm:$0x3]
  %v1032 = vrot.slane %v1024, 4
  %v1033 = vadd.f32 %v1024, %v1032
  %v1034 = vrot.slane %v1033, 2
  %v1035 = vadd.f32 %v1033, %v1034
  %v1036 = vrot.slane %v1035, 1
  %v1037 = vadd.f32 %v1035, %v1036
  %v1038 = vrot.slane %v1026, 4
  %v1039 = vadd.f32 %v1026, %v1038
  %v1040 = vrot.slane %v1039, 2
  %v1041 = vadd.f32 %v1039, %v1040
  %v1042 = vrot.slane %v1041, 1
  %v1043 = vadd.f32 %v1041, %v1042
  %v1044 = vmul.f32 %v1037, %v370
  %v1045 = vmul.f32 %v1043, %v370
  %v1046 = vsub.f32 %v1024, %v1044
  %v1047 = vsub.f32 %v1026, %v1045
  %v1048 = vmul.f32 %v1046, %v1046
  %v1049 = vmul.f32 %v1047, %v1047
  %v1050 = vrot.slane %v1048, 4
  %v1051 = vadd.f32 %v1048, %v1050
  %v1052 = vrot.slane %v1051, 2
  %v1053 = vadd.f32 %v1051, %v1052
  %v1054 = vrot.slane %v1053, 1
  %v1055 = vadd.f32 %v1053, %v1054
  %v1056 = vrot.slane %v1049, 4
  %v1057 = vadd.f32 %v1049, %v1056
  %v1058 = vrot.slane %v1057, 2
  %v1059 = vadd.f32 %v1057, %v1058
  %v1060 = vrot.slane %v1059, 1
  %v1061 = vadd.f32 %v1059, %v1060
  %v1062 = vmul.f32 %v1055, %v370
  %v1063 = vmul.f32 %v1061, %v370
  %v1064 = vadd.f32 %v1062, 1e-05
  %v1065 = vadd.f32 %v1063, 1e-05
  %v1066 = vrsqrt.pop %v1064
  %v1067 = vrsqrt.pop %v1065
  %v1068 = vmul.f32 %v1046, %v1066
  %v1069 = vmul.f32 %v1047, %v1067
  %v1071 = vlaneseq
  %v1072 = vshrl.u32 %v1071, 7
  %v1073 = vsub.s32 0, %v1072
  %v1074 = vrot.slane %v1030, %v1073
  %v1075 = vlaneseq
  %v1076 = vshrl.u32 %v1075, 7
  %v1077 = vsub.s32 1, %v1076
  %v1078 = vrot.slane %v1030, %v1077
  %v1081 = vmul.f32 %v1068, %v1074
  %v1082 = vmul.f32 %v1069, %v1078
  %v1084 = vlaneseq
  %v1085 = vshrl.u32 %v1084, 7
  %v1086 = vsub.s32 0, %v1085
  %v1087 = vrot.slane %v1031, %v1086
  %v1088 = vlaneseq
  %v1089 = vshrl.u32 %v1088, 7
  %v1090 = vsub.s32 1, %v1089
  %v1091 = vrot.slane %v1031, %v1090
  %v1094 = vadd.f32 %v1081, %v1087
  %v1095 = vadd.f32 %v1082, %v1091
  %v1096 = vmax.f32 %v1094, 0.0
  %v1097 = vmax.f32 %v1095, 0.0
  %v1098 = vpack.c.bf16 %v1096, %v1096
  %v1099 = vpack.c.bf16 %v1097, %v1097
  %v1100 = vld [vmem:[%s13] sm:$0xf]
  %v1101 = vld [vmem:[%s13 + $0x4] sm:$0xf]
  %v1102 = vld [vmem:[%s13 + $0x8] sm:$0xf]
  %v1103 = vld [vmem:[%s13 + $0xc] sm:$0xf]
  %v1104 = vld [vmem:[%s13 + $0x10] sm:$0xf]
  %v1105 = vld [vmem:[%s13 + $0x14] sm:$0xf]
  %v1106 = vld [vmem:[%s13 + $0x18] sm:$0xf]
  %v1107 = vld [vmem:[%s13 + $0x1c] sm:$0xf]
  %v1108 = vld [vmem:[%s13 + $0x20] sm:$0xf]
  %v1109 = vld [vmem:[%s13 + $0x24] sm:$0xf]
  %v1110 = vld [vmem:[%s13 + $0x28] sm:$0xf]
  %v1111 = vld [vmem:[%s13 + $0x2c] sm:$0xf]
  %v1112 = vld [vmem:[%s13 + $0x30] sm:$0xf]
  %v1113 = vld [vmem:[%s13 + $0x34] sm:$0xf]
  %v1114 = vld [vmem:[%s13 + $0x38] sm:$0xf]
  %v1115 = vld [vmem:[%s13 + $0x3c] sm:$0xf]
  %v1116 = vld [vmem:[%s13 + $0x40] sm:$0xf]
  %v1117 = vld [vmem:[%s13 + $0x44] sm:$0xf]
  %v1118 = vld [vmem:[%s13 + $0x48] sm:$0xf]
  %v1119 = vld [vmem:[%s13 + $0x4c] sm:$0xf]
  %v1120 = vld [vmem:[%s13 + $0x50] sm:$0xf]
  %v1121 = vld [vmem:[%s13 + $0x54] sm:$0xf]
  %v1122 = vld [vmem:[%s13 + $0x58] sm:$0xf]
  %v1123 = vld [vmem:[%s13 + $0x5c] sm:$0xf]
  %v1124 = vld [vmem:[%s13 + $0x60] sm:$0xf]
  %v1125 = vld [vmem:[%s13 + $0x64] sm:$0xf]
  %v1126 = vld [vmem:[%s13 + $0x68] sm:$0xf]
  %v1127 = vld [vmem:[%s13 + $0x6c] sm:$0xf]
  %v1128 = vld [vmem:[%s13 + $0x70] sm:$0xf]
  %v1129 = vld [vmem:[%s13 + $0x74] sm:$0xf]
  %v1130 = vld [vmem:[%s13 + $0x78] sm:$0xf]
  %v1131 = vld [vmem:[%s13 + $0x7c] sm:$0xf]
  %v1132 = vld [vmem:[%s14] sm:$0x1]
  %v1134 = vlaneseq
  %v1135 = vshrl.u32 %v1134, 7
  %v1136 = vsub.s32 0, %v1135
  %v1137 = vrot.slane %v1132, %v1136
  %v1171 = vunpack.c.l.b16 %v1100
  %v1172 = vunpack.c.l.b16 %v1101
  %v1173 = vunpack.c.l.b16 %v1102
  %v1174 = vunpack.c.l.b16 %v1103
  %v1175 = vunpack.c.l.b16 %v1104
  %v1176 = vunpack.c.l.b16 %v1105
  %v1177 = vunpack.c.l.b16 %v1106
  %v1178 = vunpack.c.l.b16 %v1107
  %v1179 = vunpack.c.l.b16 %v1108
  %v1180 = vunpack.c.l.b16 %v1109
  %v1181 = vunpack.c.l.b16 %v1110
  %v1182 = vunpack.c.l.b16 %v1111
  %v1183 = vunpack.c.l.b16 %v1112
  %v1184 = vunpack.c.l.b16 %v1113
  %v1185 = vunpack.c.l.b16 %v1114
  %v1186 = vunpack.c.l.b16 %v1115
  %v1187 = vunpack.c.l.b16 %v1116
  %v1188 = vunpack.c.l.b16 %v1117
  %v1189 = vunpack.c.l.b16 %v1118
  %v1190 = vunpack.c.l.b16 %v1119
  %v1191 = vunpack.c.l.b16 %v1120
  %v1192 = vunpack.c.l.b16 %v1121
  %v1193 = vunpack.c.l.b16 %v1122
  %v1194 = vunpack.c.l.b16 %v1123
  %v1195 = vunpack.c.l.b16 %v1124
  %v1196 = vunpack.c.l.b16 %v1125
  %v1197 = vunpack.c.l.b16 %v1126
  %v1198 = vunpack.c.l.b16 %v1127
  %v1199 = vunpack.c.l.b16 %v1128
  %v1200 = vunpack.c.l.b16 %v1129
  %v1201 = vunpack.c.l.b16 %v1130
  %v1202 = vunpack.c.l.b16 %v1131
  %v1203 = vpack.c.b16 %v1172, %v1171
  %v1204 = vpack.c.b16 %v1174, %v1173
  %v1205 = vpack.c.b16 %v1176, %v1175
  %v1206 = vpack.c.b16 %v1178, %v1177
  %v1207 = vpack.c.b16 %v1180, %v1179
  %v1208 = vpack.c.b16 %v1182, %v1181
  %v1209 = vpack.c.b16 %v1184, %v1183
  %v1210 = vpack.c.b16 %v1186, %v1185
  %v1211 = vpack.c.b16 %v1188, %v1187
  %v1212 = vpack.c.b16 %v1190, %v1189
  %v1213 = vpack.c.b16 %v1192, %v1191
  %v1214 = vpack.c.b16 %v1194, %v1193
  %v1215 = vpack.c.b16 %v1196, %v1195
  %v1216 = vpack.c.b16 %v1198, %v1197
  %v1217 = vpack.c.b16 %v1200, %v1199
  %v1218 = vpack.c.b16 %v1202, %v1201
  %1235 = vmatprep.subr.bf16.mxu0 0
  %1236 = vmatpush1.bf16.msra.mxu0 %v1210
  %1237 = vmatprep.subr.bf16.mxu0 0
  %1238 = vmatpush1.bf16.msra.mxu0 %v1209
  %1239 = vmatprep.subr.bf16.mxu0 0
  %1240 = vmatpush1.bf16.msra.mxu0 %v1208
  %1241 = vmatprep.subr.bf16.mxu0 0
  %1242 = vmatpush1.bf16.msra.mxu0 %v1207
  %1243 = vmatprep.subr.bf16.mxu0 0
  %1244 = vmatpush1.bf16.msra.mxu0 %v1206
  %1245 = vmatprep.subr.bf16.mxu0 0
  %1246 = vmatpush1.bf16.msra.mxu0 %v1205
  %1247 = vmatprep.subr.bf16.mxu0 0
  %1248 = vmatpush1.bf16.msra.mxu0 %v1204
  %1249 = vmatprep.subr.bf16.mxu0 0
  %1250 = vmatpush1.bf16.msra.mxu0 %v1203
  %1251 = vmatprep.subr.bf16.mxu0 0
  %1252 = vmatpush2.bf16.msra.mxu0 %v1218
  %1253 = vmatprep.subr.bf16.mxu0 0
  %1254 = vmatpush2.bf16.msra.mxu0 %v1217
  %1255 = vmatprep.subr.bf16.mxu0 0
  %1256 = vmatpush2.bf16.msra.mxu0 %v1216
  %1257 = vmatprep.subr.bf16.mxu0 0
  %1258 = vmatpush2.bf16.msra.mxu0 %v1215
  %1259 = vmatprep.subr.bf16.mxu0 0
  %1260 = vmatpush2.bf16.msra.mxu0 %v1214
  %1261 = vmatprep.subr.bf16.mxu0 0
  %1262 = vmatpush2.bf16.msra.mxu0 %v1213
  %1263 = vmatprep.subr.bf16.mxu0 0
  %1264 = vmatpush2.bf16.msra.mxu0 %v1212
  %1265 = vmatprep.subr.bf16.mxu0 0
  %1266 = vmatpush2.bf16.msra.mxu0 %v1211
  %1267 = vmatprep.mubr.bf16.mxu0 %v1099
  %1268 = vmatmul.mubr.bf16.gmra.mxu0 %v1098
  %v1269 = vpop.f32.mrf.mxu0
  %v1270 = vadd.f32 %v1137, %v1269
  %v1271 = vpop.f32.mrf.mxu0
  %v1272 = vpop.f32.mrf.mxu0
  %v1273 = vpop.f32.mrf.mxu0
  %1274 = vdwg.mxu0
  %v1275 = vmax.f32 %v1270, 0.0
  %v1276 = vpack.c.bf16 %v959, %v959
  %v1277 = vpack.c.bf16 %v960, %v960
  %v1278 = vld [vmem:[%s15] sm:$0xf]
  %v1279 = vld [vmem:[%s15 + $0x4] sm:$0xf]
  %v1280 = vld [vmem:[%s15 + $0x8] sm:$0xf]
  %v1281 = vld [vmem:[%s15 + $0xc] sm:$0xf]
  %v1282 = vld [vmem:[%s15 + $0x10] sm:$0xf]
  %v1283 = vld [vmem:[%s15 + $0x14] sm:$0xf]
  %v1284 = vld [vmem:[%s15 + $0x18] sm:$0xf]
  %v1285 = vld [vmem:[%s15 + $0x1c] sm:$0xf]
  %v1286 = vld [vmem:[%s15 + $0x20] sm:$0xf]
  %v1287 = vld [vmem:[%s15 + $0x24] sm:$0xf]
  %v1288 = vld [vmem:[%s15 + $0x28] sm:$0xf]
  %v1289 = vld [vmem:[%s15 + $0x2c] sm:$0xf]
  %v1290 = vld [vmem:[%s15 + $0x30] sm:$0xf]
  %v1291 = vld [vmem:[%s15 + $0x34] sm:$0xf]
  %v1292 = vld [vmem:[%s15 + $0x38] sm:$0xf]
  %v1293 = vld [vmem:[%s15 + $0x3c] sm:$0xf]
  %v1294 = vld [vmem:[%s15 + $0x40] sm:$0xf]
  %v1295 = vld [vmem:[%s15 + $0x44] sm:$0xf]
  %v1296 = vld [vmem:[%s15 + $0x48] sm:$0xf]
  %v1297 = vld [vmem:[%s15 + $0x4c] sm:$0xf]
  %v1298 = vld [vmem:[%s15 + $0x50] sm:$0xf]
  %v1299 = vld [vmem:[%s15 + $0x54] sm:$0xf]
  %v1300 = vld [vmem:[%s15 + $0x58] sm:$0xf]
  %v1301 = vld [vmem:[%s15 + $0x5c] sm:$0xf]
  %v1302 = vld [vmem:[%s15 + $0x60] sm:$0xf]
  %v1303 = vld [vmem:[%s15 + $0x64] sm:$0xf]
  %v1304 = vld [vmem:[%s15 + $0x68] sm:$0xf]
  %v1305 = vld [vmem:[%s15 + $0x6c] sm:$0xf]
  %v1306 = vld [vmem:[%s15 + $0x70] sm:$0xf]
  %v1307 = vld [vmem:[%s15 + $0x74] sm:$0xf]
  %v1308 = vld [vmem:[%s15 + $0x78] sm:$0xf]
  %v1309 = vld [vmem:[%s15 + $0x7c] sm:$0xf]
  %v1310 = vpack.c.bf16 %v1275, %v1275
  %v1311 = vld [vmem:[%s16] sm:$0xf]
  %v1312 = vld [vmem:[%s16 + $0x4] sm:$0xf]
  %v1313 = vld [vmem:[%s16 + $0x8] sm:$0xf]
  %v1314 = vld [vmem:[%s16 + $0xc] sm:$0xf]
  %v1315 = vld [vmem:[%s16 + $0x10] sm:$0xf]
  %v1316 = vld [vmem:[%s16 + $0x14] sm:$0xf]
  %v1317 = vld [vmem:[%s16 + $0x18] sm:$0xf]
  %v1318 = vld [vmem:[%s16 + $0x1c] sm:$0xf]
  %v1319 = vld [vmem:[%s16 + $0x20] sm:$0xf]
  %v1320 = vld [vmem:[%s16 + $0x24] sm:$0xf]
  %v1321 = vld [vmem:[%s16 + $0x28] sm:$0xf]
  %v1322 = vld [vmem:[%s16 + $0x2c] sm:$0xf]
  %v1323 = vld [vmem:[%s16 + $0x30] sm:$0xf]
  %v1324 = vld [vmem:[%s16 + $0x34] sm:$0xf]
  %v1325 = vld [vmem:[%s16 + $0x38] sm:$0xf]
  %v1326 = vld [vmem:[%s16 + $0x3c] sm:$0xf]
  %v1343 = vunpack.c.l.b16 %v1311
  %v1344 = vunpack.c.l.b16 %v1312
  %v1345 = vunpack.c.l.b16 %v1313
  %v1346 = vunpack.c.l.b16 %v1314
  %v1347 = vunpack.c.l.b16 %v1315
  %v1348 = vunpack.c.l.b16 %v1316
  %v1349 = vunpack.c.l.b16 %v1317
  %v1350 = vunpack.c.l.b16 %v1318
  %v1351 = vunpack.c.l.b16 %v1319
  %v1352 = vunpack.c.l.b16 %v1320
  %v1353 = vunpack.c.l.b16 %v1321
  %v1354 = vunpack.c.l.b16 %v1322
  %v1355 = vunpack.c.l.b16 %v1323
  %v1356 = vunpack.c.l.b16 %v1324
  %v1357 = vunpack.c.l.b16 %v1325
  %v1358 = vunpack.c.l.b16 %v1326
  %v1359 = vpack.c.b16 %v1344, %v1343
  %v1360 = vpack.c.b16 %v1346, %v1345
  %v1361 = vpack.c.b16 %v1348, %v1347
  %v1362 = vpack.c.b16 %v1350, %v1349
  %v1363 = vpack.c.b16 %v1352, %v1351
  %v1364 = vpack.c.b16 %v1354, %v1353
  %v1365 = vpack.c.b16 %v1356, %v1355
  %v1366 = vpack.c.b16 %v1358, %v1357
  %1375 = vmatprep.subr.bf16.mxu0 0
  %1376 = vmatpush1.bf16.msra.mxu0 %v1366
  %1377 = vmatprep.subr.bf16.mxu0 0
  %1378 = vmatpush1.bf16.msra.mxu0 %v1365
  %1379 = vmatprep.subr.bf16.mxu0 0
  %1380 = vmatpush1.bf16.msra.mxu0 %v1364
  %1381 = vmatprep.subr.bf16.mxu0 0
  %1382 = vmatpush1.bf16.msra.mxu0 %v1363
  %1383 = vmatprep.subr.bf16.mxu0 0
  %1384 = vmatpush1.bf16.msra.mxu0 %v1362
  %1385 = vmatprep.subr.bf16.mxu0 0
  %1386 = vmatpush1.bf16.msra.mxu0 %v1361
  %1387 = vmatprep.subr.bf16.mxu0 0
  %1388 = vmatpush1.bf16.msra.mxu0 %v1360
  %1389 = vmatprep.subr.bf16.mxu0 0
  %1390 = vmatpush1.bf16.msra.mxu0 %v1359
  %1391 = vmatprep.subr.bf16.mxu0 0
  %1392 = vmatpush2.bf16.msra.mxu0 0
  %1393 = vmatprep.subr.bf16.mxu0 0
  %1394 = vmatpush2.bf16.msra.mxu0 0
  %1395 = vmatprep.subr.bf16.mxu0 0
  %1396 = vmatpush2.bf16.msra.mxu0 0
  %1397 = vmatprep.subr.bf16.mxu0 0
  %1398 = vmatpush2.bf16.msra.mxu0 0
  %1399 = vmatprep.subr.bf16.mxu0 0
  %1400 = vmatpush2.bf16.msra.mxu0 0
  %1401 = vmatprep.subr.bf16.mxu0 0
  %1402 = vmatpush2.bf16.msra.mxu0 0
  %1403 = vmatprep.subr.bf16.mxu0 0
  %1404 = vmatpush2.bf16.msra.mxu0 0
  %1405 = vmatprep.subr.bf16.mxu0 0
  %1406 = vmatpush2.bf16.msra.mxu0 0
  %1407 = vmatprep.mubr.bf16.mxu0 0
  %1408 = vmatmul.mubr.bf16.gmra.mxu0 %v1310
  %v1409 = vpop.f32.mrf.mxu0
  %v1410 = vadd.f32 0.0, %v1409
  %v1411 = vpop.f32.mrf.mxu0
  %v1412 = vpop.f32.mrf.mxu0
  %v1413 = vpop.f32.mrf.mxu0
  %1414 = vdwg.mxu0
  %v1447 = vunpack.c.l.b16 %v1278
  %v1448 = vunpack.c.l.b16 %v1279
  %v1449 = vunpack.c.l.b16 %v1280
  %v1450 = vunpack.c.l.b16 %v1281
  %v1451 = vunpack.c.l.b16 %v1282
  %v1452 = vunpack.c.l.b16 %v1283
  %v1453 = vunpack.c.l.b16 %v1284
  %v1454 = vunpack.c.l.b16 %v1285
  %v1455 = vunpack.c.l.b16 %v1286
  %v1456 = vunpack.c.l.b16 %v1287
  %v1457 = vunpack.c.l.b16 %v1288
  %v1458 = vunpack.c.l.b16 %v1289
  %v1459 = vunpack.c.l.b16 %v1290
  %v1460 = vunpack.c.l.b16 %v1291
  %v1461 = vunpack.c.l.b16 %v1292
  %v1462 = vunpack.c.l.b16 %v1293
  %v1463 = vunpack.c.l.b16 %v1294
  %v1464 = vunpack.c.l.b16 %v1295
  %v1465 = vunpack.c.l.b16 %v1296
  %v1466 = vunpack.c.l.b16 %v1297
  %v1467 = vunpack.c.l.b16 %v1298
  %v1468 = vunpack.c.l.b16 %v1299
  %v1469 = vunpack.c.l.b16 %v1300
  %v1470 = vunpack.c.l.b16 %v1301
  %v1471 = vunpack.c.l.b16 %v1302
  %v1472 = vunpack.c.l.b16 %v1303
  %v1473 = vunpack.c.l.b16 %v1304
  %v1474 = vunpack.c.l.b16 %v1305
  %v1475 = vunpack.c.l.b16 %v1306
  %v1476 = vunpack.c.l.b16 %v1307
  %v1477 = vunpack.c.l.b16 %v1308
  %v1478 = vunpack.c.l.b16 %v1309
  %v1479 = vpack.c.b16 %v1448, %v1447
  %v1480 = vpack.c.b16 %v1450, %v1449
  %v1481 = vpack.c.b16 %v1452, %v1451
  %v1482 = vpack.c.b16 %v1454, %v1453
  %v1483 = vpack.c.b16 %v1456, %v1455
  %v1484 = vpack.c.b16 %v1458, %v1457
  %v1485 = vpack.c.b16 %v1460, %v1459
  %v1486 = vpack.c.b16 %v1462, %v1461
  %v1487 = vpack.c.b16 %v1464, %v1463
  %v1488 = vpack.c.b16 %v1466, %v1465
  %v1489 = vpack.c.b16 %v1468, %v1467
  %v1490 = vpack.c.b16 %v1470, %v1469
  %v1491 = vpack.c.b16 %v1472, %v1471
  %v1492 = vpack.c.b16 %v1474, %v1473
  %v1493 = vpack.c.b16 %v1476, %v1475
  %v1494 = vpack.c.b16 %v1478, %v1477
  %1511 = vmatprep.subr.bf16.mxu0 0
  %1512 = vmatpush1.bf16.msra.mxu0 %v1486
  %1513 = vmatprep.subr.bf16.mxu0 0
  %1514 = vmatpush1.bf16.msra.mxu0 %v1485
  %1515 = vmatprep.subr.bf16.mxu0 0
  %1516 = vmatpush1.bf16.msra.mxu0 %v1484
  %1517 = vmatprep.subr.bf16.mxu0 0
  %1518 = vmatpush1.bf16.msra.mxu0 %v1483
  %1519 = vmatprep.subr.bf16.mxu0 0
  %1520 = vmatpush1.bf16.msra.mxu0 %v1482
  %1521 = vmatprep.subr.bf16.mxu0 0
  %1522 = vmatpush1.bf16.msra.mxu0 %v1481
  %1523 = vmatprep.subr.bf16.mxu0 0
  %1524 = vmatpush1.bf16.msra.mxu0 %v1480
  %1525 = vmatprep.subr.bf16.mxu0 0
  %1526 = vmatpush1.bf16.msra.mxu0 %v1479
  %1527 = vmatprep.subr.bf16.mxu0 0
  %1528 = vmatpush2.bf16.msra.mxu0 %v1494
  %1529 = vmatprep.subr.bf16.mxu0 0
  %1530 = vmatpush2.bf16.msra.mxu0 %v1493
  %1531 = vmatprep.subr.bf16.mxu0 0
  %1532 = vmatpush2.bf16.msra.mxu0 %v1492
  %1533 = vmatprep.subr.bf16.mxu0 0
  %1534 = vmatpush2.bf16.msra.mxu0 %v1491
  %1535 = vmatprep.subr.bf16.mxu0 0
  %1536 = vmatpush2.bf16.msra.mxu0 %v1490
  %1537 = vmatprep.subr.bf16.mxu0 0
  %1538 = vmatpush2.bf16.msra.mxu0 %v1489
  %1539 = vmatprep.subr.bf16.mxu0 0
  %1540 = vmatpush2.bf16.msra.mxu0 %v1488
  %1541 = vmatprep.subr.bf16.mxu0 0
  %1542 = vmatpush2.bf16.msra.mxu0 %v1487
  %1543 = vmatprep.mubr.bf16.mxu0 %v1277
  %1544 = vmatmul.mubr.bf16.gmra.mxu0 %v1276
  %v1545 = vpop.f32.mrf.mxu0
  %v1546 = vadd.f32 %v1410, %v1545
  %v1547 = vpop.f32.mrf.mxu0
  %v1548 = vpop.f32.mrf.mxu0
  %v1549 = vpop.f32.mrf.mxu0
  %1550 = vdwg.mxu0
  %v1551 = vld [vmem:[%s3] sm:$0xf]
  %v1552 = vld [vmem:[%s17] sm:$0x3]
  %vm1553 = vcmask 31744
  %v1555 = vsel %vm1553, %v1551, 0
  %vm1557 = vcmask 1041408
  %v1559 = vsel %vm1557, %v1552, 0
  %1561 = vmatprep.subr.bf16.mxu0 0
  %1562 = vmatpush1.bf16.msra.mxu0 0
  %1563 = vmatprep.subr.bf16.mxu0 0
  %1564 = vmatpush1.bf16.msra.mxu0 0
  %1565 = vmatprep.subr.bf16.mxu0 0
  %1566 = vmatpush1.bf16.msra.mxu0 0
  %1567 = vmatprep.subr.bf16.mxu0 0
  %1568 = vmatpush1.bf16.msra.mxu0 0
  %1569 = vmatprep.subr.bf16.mxu0 0
  %1570 = vmatpush1.bf16.msra.mxu0 0
  %1571 = vmatprep.subr.bf16.mxu0 0
  %1572 = vmatpush1.bf16.msra.mxu0 0
  %1573 = vmatprep.subr.bf16.mxu0 0
  %1574 = vmatpush1.bf16.msra.mxu0 0
  %1575 = vmatprep.subr.bf16.mxu0 0
  %1576 = vmatpush1.bf16.msra.mxu0 %v1559
  %1577 = vmatprep.subr.bf16.mxu0 0
  %1578 = vmatpush2.bf16.msra.mxu0 0
  %1579 = vmatprep.subr.bf16.mxu0 0
  %1580 = vmatpush2.bf16.msra.mxu0 0
  %1581 = vmatprep.subr.bf16.mxu0 0
  %1582 = vmatpush2.bf16.msra.mxu0 0
  %1583 = vmatprep.subr.bf16.mxu0 0
  %1584 = vmatpush2.bf16.msra.mxu0 0
  %1585 = vmatprep.subr.bf16.mxu0 0
  %1586 = vmatpush2.bf16.msra.mxu0 0
  %1587 = vmatprep.subr.bf16.mxu0 0
  %1588 = vmatpush2.bf16.msra.mxu0 0
  %1589 = vmatprep.subr.bf16.mxu0 0
  %1590 = vmatpush2.bf16.msra.mxu0 0
  %1591 = vmatprep.subr.bf16.mxu0 0
  %1592 = vmatpush2.bf16.msra.mxu0 0
  %1593 = vmatprep.mubr.bf16.mxu0 0
  %1594 = vmatmul.mubr.bf16.gmra.mxu0 %v1555
  %v1595 = vpop.f32.mrf.mxu0
  %v1596 = vadd.f32 0.0, %v1595
  %v1597 = vpop.f32.mrf.mxu0
  %v1598 = vpop.f32.mrf.mxu0
  %v1599 = vpop.f32.mrf.mxu0
  %1600 = vdwg.mxu0
  %v1601 = vadd.f32 %v1546, %v1596
  %v1602 = vld [vmem:[%s18] sm:$0x1]
  %v1604 = vlaneseq
  %v1605 = vshrl.u32 %v1604, 7
  %v1606 = vsub.s32 0, %v1605
  %v1607 = vrot.slane %v1602, %v1606
  %v1609 = vadd.f32 %v1601, %v1607
  %v1610 = vmax.f32 %v1609, 0.0
  %v1611 = vpack.c.bf16 %v1610, %v1610
  %v1612 = vld [vmem:[%s19] sm:$0xf]
  %v1613 = vld [vmem:[%s19 + $0x4] sm:$0xf]
  %v1614 = vld [vmem:[%s19 + $0x8] sm:$0xf]
  %v1615 = vld [vmem:[%s19 + $0xc] sm:$0xf]
  %v1616 = vld [vmem:[%s19 + $0x10] sm:$0xf]
  %v1617 = vld [vmem:[%s19 + $0x14] sm:$0xf]
  %v1618 = vld [vmem:[%s19 + $0x18] sm:$0xf]
  %v1619 = vld [vmem:[%s19 + $0x1c] sm:$0xf]
  %v1620 = vld [vmem:[%s19 + $0x20] sm:$0xf]
  %v1621 = vld [vmem:[%s19 + $0x24] sm:$0xf]
  %v1622 = vld [vmem:[%s19 + $0x28] sm:$0xf]
  %v1623 = vld [vmem:[%s19 + $0x2c] sm:$0xf]
  %v1624 = vld [vmem:[%s19 + $0x30] sm:$0xf]
  %v1625 = vld [vmem:[%s19 + $0x34] sm:$0xf]
  %v1626 = vld [vmem:[%s19 + $0x38] sm:$0xf]
  %v1627 = vld [vmem:[%s19 + $0x3c] sm:$0xf]
  %v1628 = vld [vmem:[%s20] sm:$0x1]
  %v1630 = vlaneseq
  %v1631 = vshrl.u32 %v1630, 7
  %v1632 = vsub.s32 0, %v1631
  %v1633 = vrot.slane %v1628, %v1632
  %v1651 = vunpack.c.l.b16 %v1612
  %v1652 = vunpack.c.l.b16 %v1613
  %v1653 = vunpack.c.l.b16 %v1614
  %v1654 = vunpack.c.l.b16 %v1615
  %v1655 = vunpack.c.l.b16 %v1616
  %v1656 = vunpack.c.l.b16 %v1617
  %v1657 = vunpack.c.l.b16 %v1618
  %v1658 = vunpack.c.l.b16 %v1619
  %v1659 = vunpack.c.l.b16 %v1620
  %v1660 = vunpack.c.l.b16 %v1621
  %v1661 = vunpack.c.l.b16 %v1622
  %v1662 = vunpack.c.l.b16 %v1623
  %v1663 = vunpack.c.l.b16 %v1624
  %v1664 = vunpack.c.l.b16 %v1625
  %v1665 = vunpack.c.l.b16 %v1626
  %v1666 = vunpack.c.l.b16 %v1627
  %v1667 = vpack.c.b16 %v1652, %v1651
  %v1668 = vpack.c.b16 %v1654, %v1653
  %v1669 = vpack.c.b16 %v1656, %v1655
  %v1670 = vpack.c.b16 %v1658, %v1657
  %v1671 = vpack.c.b16 %v1660, %v1659
  %v1672 = vpack.c.b16 %v1662, %v1661
  %v1673 = vpack.c.b16 %v1664, %v1663
  %v1674 = vpack.c.b16 %v1666, %v1665
  %1683 = vmatprep.subr.bf16.mxu0 0
  %1684 = vmatpush1.bf16.msra.mxu0 %v1674
  %1685 = vmatprep.subr.bf16.mxu0 0
  %1686 = vmatpush1.bf16.msra.mxu0 %v1673
  %1687 = vmatprep.subr.bf16.mxu0 0
  %1688 = vmatpush1.bf16.msra.mxu0 %v1672
  %1689 = vmatprep.subr.bf16.mxu0 0
  %1690 = vmatpush1.bf16.msra.mxu0 %v1671
  %1691 = vmatprep.subr.bf16.mxu0 0
  %1692 = vmatpush1.bf16.msra.mxu0 %v1670
  %1693 = vmatprep.subr.bf16.mxu0 0
  %1694 = vmatpush1.bf16.msra.mxu0 %v1669
  %1695 = vmatprep.subr.bf16.mxu0 0
  %1696 = vmatpush1.bf16.msra.mxu0 %v1668
  %1697 = vmatprep.subr.bf16.mxu0 0
  %1698 = vmatpush1.bf16.msra.mxu0 %v1667
  %1699 = vmatprep.subr.bf16.mxu0 0
  %1700 = vmatpush2.bf16.msra.mxu0 0
  %1701 = vmatprep.subr.bf16.mxu0 0
  %1702 = vmatpush2.bf16.msra.mxu0 0
  %1703 = vmatprep.subr.bf16.mxu0 0
  %1704 = vmatpush2.bf16.msra.mxu0 0
  %1705 = vmatprep.subr.bf16.mxu0 0
  %1706 = vmatpush2.bf16.msra.mxu0 0
  %1707 = vmatprep.subr.bf16.mxu0 0
  %1708 = vmatpush2.bf16.msra.mxu0 0
  %1709 = vmatprep.subr.bf16.mxu0 0
  %1710 = vmatpush2.bf16.msra.mxu0 0
  %1711 = vmatprep.subr.bf16.mxu0 0
  %1712 = vmatpush2.bf16.msra.mxu0 0
  %1713 = vmatprep.subr.bf16.mxu0 0
  %1714 = vmatpush2.bf16.msra.mxu0 0
  %1715 = vmatprep.mubr.bf16.mxu0 0
  %1716 = vmatmul.mubr.bf16.gmra.mxu0 %v1611
  %v1717 = vpop.f32.mrf.mxu0
  %v1718 = vadd.f32 %v1633, %v1717
  %v1719 = vpop.f32.mrf.mxu0
  %v1720 = vpop.f32.mrf.mxu0
  %v1721 = vpop.f32.mrf.mxu0
  %1722 = vdwg.mxu0
  %v1723 = vmax.f32 %v1718, 0.0
  %v1724 = vpack.c.bf16 %v1723, %v1723
  %v1725 = vld [vmem:[%s21] sm:$0xf]
  %v1726 = vld [vmem:[%s21 + $0x4] sm:$0xf]
  %v1727 = vld [vmem:[%s21 + $0x8] sm:$0xf]
  %v1728 = vld [vmem:[%s21 + $0xc] sm:$0xf]
  %v1729 = vld [vmem:[%s21 + $0x10] sm:$0xf]
  %v1730 = vld [vmem:[%s21 + $0x14] sm:$0xf]
  %v1731 = vld [vmem:[%s21 + $0x18] sm:$0xf]
  %v1732 = vld [vmem:[%s21 + $0x1c] sm:$0xf]
  %v1733 = vld [vmem:[%s21 + $0x20] sm:$0xf]
  %v1734 = vld [vmem:[%s21 + $0x24] sm:$0xf]
  %v1735 = vld [vmem:[%s21 + $0x28] sm:$0xf]
  %v1736 = vld [vmem:[%s21 + $0x2c] sm:$0xf]
  %v1737 = vld [vmem:[%s21 + $0x30] sm:$0xf]
  %v1738 = vld [vmem:[%s21 + $0x34] sm:$0xf]
  %v1739 = vld [vmem:[%s21 + $0x38] sm:$0xf]
  %v1740 = vld [vmem:[%s21 + $0x3c] sm:$0xf]
  %v1741 = vld [vmem:[%s22] sm:$0x1]
  %v1743 = vlaneseq
  %v1744 = vshrl.u32 %v1743, 7
  %v1745 = vsub.s32 0, %v1744
  %v1746 = vrot.slane %v1741, %v1745
  %v1764 = vunpack.c.l.b16 %v1725
  %v1765 = vunpack.c.l.b16 %v1726
  %v1766 = vunpack.c.l.b16 %v1727
  %v1767 = vunpack.c.l.b16 %v1728
  %v1768 = vunpack.c.l.b16 %v1729
  %v1769 = vunpack.c.l.b16 %v1730
  %v1770 = vunpack.c.l.b16 %v1731
  %v1771 = vunpack.c.l.b16 %v1732
  %v1772 = vunpack.c.l.b16 %v1733
  %v1773 = vunpack.c.l.b16 %v1734
  %v1774 = vunpack.c.l.b16 %v1735
  %v1775 = vunpack.c.l.b16 %v1736
  %v1776 = vunpack.c.l.b16 %v1737
  %v1777 = vunpack.c.l.b16 %v1738
  %v1778 = vunpack.c.l.b16 %v1739
  %v1779 = vunpack.c.l.b16 %v1740
  %v1780 = vpack.c.b16 %v1765, %v1764
  %v1781 = vpack.c.b16 %v1767, %v1766
  %v1782 = vpack.c.b16 %v1769, %v1768
  %v1783 = vpack.c.b16 %v1771, %v1770
  %v1784 = vpack.c.b16 %v1773, %v1772
  %v1785 = vpack.c.b16 %v1775, %v1774
  %v1786 = vpack.c.b16 %v1777, %v1776
  %v1787 = vpack.c.b16 %v1779, %v1778
  %1796 = vmatprep.subr.bf16.mxu0 0
  %1797 = vmatpush1.bf16.msra.mxu0 %v1787
  %1798 = vmatprep.subr.bf16.mxu0 0
  %1799 = vmatpush1.bf16.msra.mxu0 %v1786
  %1800 = vmatprep.subr.bf16.mxu0 0
  %1801 = vmatpush1.bf16.msra.mxu0 %v1785
  %1802 = vmatprep.subr.bf16.mxu0 0
  %1803 = vmatpush1.bf16.msra.mxu0 %v1784
  %1804 = vmatprep.subr.bf16.mxu0 0
  %1805 = vmatpush1.bf16.msra.mxu0 %v1783
  %1806 = vmatprep.subr.bf16.mxu0 0
  %1807 = vmatpush1.bf16.msra.mxu0 %v1782
  %1808 = vmatprep.subr.bf16.mxu0 0
  %1809 = vmatpush1.bf16.msra.mxu0 %v1781
  %1810 = vmatprep.subr.bf16.mxu0 0
  %1811 = vmatpush1.bf16.msra.mxu0 %v1780
  %1812 = vmatprep.subr.bf16.mxu0 0
  %1813 = vmatpush2.bf16.msra.mxu0 0
  %1814 = vmatprep.subr.bf16.mxu0 0
  %1815 = vmatpush2.bf16.msra.mxu0 0
  %1816 = vmatprep.subr.bf16.mxu0 0
  %1817 = vmatpush2.bf16.msra.mxu0 0
  %1818 = vmatprep.subr.bf16.mxu0 0
  %1819 = vmatpush2.bf16.msra.mxu0 0
  %1820 = vmatprep.subr.bf16.mxu0 0
  %1821 = vmatpush2.bf16.msra.mxu0 0
  %1822 = vmatprep.subr.bf16.mxu0 0
  %1823 = vmatpush2.bf16.msra.mxu0 0
  %1824 = vmatprep.subr.bf16.mxu0 0
  %1825 = vmatpush2.bf16.msra.mxu0 0
  %1826 = vmatprep.subr.bf16.mxu0 0
  %1827 = vmatpush2.bf16.msra.mxu0 0
  %1828 = vmatprep.mubr.bf16.mxu0 0
  %1829 = vmatmul.mubr.bf16.gmra.mxu0 %v1724
  %v1830 = vpop.f32.mrf.mxu0
  %v1831 = vadd.f32 %v1746, %v1830
  %v1832 = vpop.f32.mrf.mxu0
  %v1833 = vpop.f32.mrf.mxu0
  %v1834 = vpop.f32.mrf.mxu0
  %1835 = vdwg.mxu0
  %v1836 = vlaneseq
  %v1837 = vand.u32 %v1836, 127
  %vm1838 = vcmp.ge.s32.totalorder %v1837, 32
  %vm1839 = vcmp.lt.s32.totalorder %v1837, 36
  %vm1840 = vmand %vm1838, %vm1839
  %v1841 = vxor.u32 %v1831, 2147483648
  %v1842 = vmul.f32 %v1841, 1.442695
  %v1843 = vpow.pop %v1842
  %v1844 = vadd.f32 %v1843, 1.0
  %v1845 = vrcp.pop %v1844
  %v1846 = vmul.f32 1.0, %v1845
  %v1847 = vsel %vm1840, %v1846, 0.0
  %v1848 = vadd.f32 %v1610, %v1847
  %1849 = vst [vmem:[%s23] sm:$0xff] %v1848
  // Predicated region
  $region94: #{_encoder_forward_impl.1} parent=0 // pred_check
    _
  $region95: #{_encoder_forward_impl.1} parent=0 // pred_check_branch
    %1851 = sbr.rel (0) target = $region97
  $region96: #{_encoder_forward_impl.1} parent=0 // pred_region
    _
  $region97: #{_encoder_forward_impl.1} parent=0 // pred_fallthru
    _
  // Predicated region
  $region98: #{_encoder_forward_impl.1} parent=0 // pred_check
    _
  $region99: #{_encoder_forward_impl.1} parent=0 // pred_check_branch
    %1853 = sbr.rel (0) target = $region101
  $region100: #{_encoder_forward_impl.1} parent=0 // pred_region
    _
  $region101: #{_encoder_forward_impl.1} parent=0 // pred_fallthru
    _

</llo_original>
